<compile_context>
chip_gen: v5e
topology: v5e:2x2
jax: 0.10.0
libtpu: 0.0.40
codegen_flags: <defaults>
</compile_context>

<pallas_src>
import functools

import jax
import jax.numpy as jnp
from jax.experimental import pallas as pl
from jax.experimental.pallas import tpu as pltpu

LN_EPS = 1e-5      # nn.LayerNorm default eps
LANE = 128         # TPU lane width
SUBLANE = 8        # TPU sublane width


def _round_up(n, m):
    return ((n + m - 1) // m) * m


def _cdiv(a, b):
    return (a + b - 1) // b


def _default_vmem_limit():
    """~75% of the chip's VMEM (capped), so v5e/v6e 128 MiB parts aren't limited to 48 MiB."""
    try:
        cap = int(pltpu.get_tpu_info().vmem_capacity_bytes)
    except Exception:
        cap = 64 * 1024 * 1024
    return min(int(cap * 0.75), 100 * 1024 * 1024)


def _default_compute_dtype():
    """bf16 elementwise phase only on chips with bf16 VPU/EUP (v6e/v7x); f32 otherwise."""
    try:
        kind = jax.devices()[0].device_kind.lower()
    except Exception:
        return jnp.float32
    if any(tag in kind for tag in ("v6", "v7", "7x")):
        return jnp.bfloat16
    return jnp.float32


def _resident_spec(shape, single_buffer):
    """BlockSpec for a parameter whose block never changes across grid steps."""
    index_map = lambda i: (0,) * len(shape)
    if single_buffer:
        try:
            return pl.BlockSpec(shape, index_map, pipeline_mode=pl.Buffered(1))
        except TypeError:  # older BlockSpec without pipeline_mode
            pass
    return pl.BlockSpec(shape, index_map)


# ----------------------------- kernel ---------------------------------------

def _mlp_fused_kernel(x_ref, *refs, n_layers, true_dims, norm_flags,
                      multiple_outputs, compute_dtype):
    """Fused MLP for one batch tile.

    refs = [w0, b0, g0, beta0, ..., w_{L-1}, b_{L-1}, g_{L-1}, beta_{L-1}, out_refs...]
    Activations never leave the chip between layers.
    """
    param_refs = refs[: 4 * n_layers]
    out_refs = refs[4 * n_layers:]

    a = x_ref[...].astype(jnp.bfloat16)                       # (TILE_B, n_in) -> bf16 MXU input
    act = None
    for li in range(n_layers):
        w_ref, b_ref, g_ref, beta_ref = param_refs[4 * li: 4 * li + 4]
        # bf16 x bf16 -> f32 accumulate on the MXU.
        h = jnp.dot(a, w_ref[...], preferred_element_type=jnp.float32)
        h = h + b_ref[...]                                     # f32 bias (pad lanes == 0)
        # Elementwise phase in compute_dtype (bf16 on v6e/v7x, f32 on v5e).
        act = jnp.tanh(h.astype(compute_dtype))
        if norm_flags[li]:
            inv_n = jnp.float32(1.0 / true_dims[li])
            # LN statistics always in f32 (single pass).  Padded lanes are exactly zero
            # (zero weight cols / bias pad), so dividing by the true width is exact.
            a32 = act.astype(jnp.float32)
            s = jnp.sum(a32, axis=-1, keepdims=True)
            ss = jnp.sum(a32 * a32, axis=-1, keepdims=True)
            mean = s * inv_n
            var = ss * inv_n - mean * mean
            inv_std = jax.lax.rsqrt(var + LN_EPS)
            act = (act - mean.astype(compute_dtype)) * inv_std.astype(compute_dtype)
            # pad lanes: gamma = beta = 0 -> stay exactly zero for the next layer's matmul
            act = act * g_ref[...].astype(compute_dtype) + beta_ref[...].astype(compute_dtype)
        # nn.Dropout(p) is identity in eval mode.
        if multiple_outputs:
            out_refs[li][...] = act.astype(out_refs[li].dtype)
        if li + 1 < n_layers:
            a = act.astype(jnp.bfloat16)                       # narrow MXU input for next layer
    if not multiple_outputs:
        out_refs[0][...] = act.astype(out_refs[0].dtype)


# ----------------------------- params ---------------------------------------

def init_mlp_params(key, n_in, n_out, n_hidden):
    """Linear init follows PyTorch default U(-1/sqrt(n_i), 1/sqrt(n_i)); LN gamma=1, beta=0."""
    dims = list(zip([n_in] + n_hidden, n_hidden + [n_out]))
    params = []
    for n_i, n_o in dims:
        key, kw, kb = jax.random.split(key, 3)
        bound = 1.0 / float(n_i) ** 0.5
        w = jax.random.uniform(kw, (n_i, n_o), jnp.float32, -bound, bound)
        b = jax.random.uniform(kb, (n_o,), jnp.float32, -bound, bound)
        gamma = jnp.ones((n_o,), jnp.float32)
        beta = jnp.zeros((n_o,), jnp.float32)
        params.append((w, b, gamma, beta))
    return params


def prepare_mlp_params(params):
    """Pad/cast parameters ONCE (hoisted out of the per-call path).

    Output feature dims are padded to 128 lanes with zeros; the K dim of layer 0 keeps the
    true n_in (so x needs no lane padding), later layers' K equals the previous padded width
    with zero pad rows.  Weights are stored bf16; bias/gamma/beta stay f32 (tiny).
    """
    prepared = []
    true_dims = tuple(int(w.shape[1]) for (w, _, _, _) in params)
    prev_width = int(params[0][0].shape[0])      # true n_in
    for (w, b, g, beta) in params:
        n_i, n_o = w.shape
        n_o_p = _round_up(n_o, LANE)
        k_p = prev_width
        w_p = jnp.zeros((k_p, n_o_p), jnp.bfloat16).at[:n_i, :n_o].set(w.astype(jnp.bfloat16))
        b_p = jnp.zeros((1, n_o_p), jnp.float32).at[0, :n_o].set(b)
        g_p = jnp.zeros((1, n_o_p), jnp.float32).at[0, :n_o].set(g)
        be_p = jnp.zeros((1, n_o_p), jnp.float32).at[0, :n_o].set(beta)
        prepared.append((w_p, b_p, g_p, be_p))
        prev_width = n_o_p
    return prepared, true_dims


# ----------------------------- forward ---------------------------------------

def mlp_forward(x, prepared, true_dims, *, multiple_outputs=False, norm_last_layer=True,
                tile_b=512, compute_dtype=jnp.float32, single_buffer_params=True,
                out_dtype=jnp.float32):
    """Equivalent of MLP.forward (eval mode), fused into one Pallas kernel."""
    n_layers = len(prepared)
    norm_flags = tuple((i < n_layers - 1 or norm_last_layer) for i in range(n_layers))
    B, n_in = x.shape
    out_pads = tuple(int(w.shape[1]) for (w, _, _, _) in prepared)
    out_itemsize = jnp.dtype(out_dtype).itemsize

    # --- batch tiling: balanced tiles (no pad blow-up), >=2 tiles when possible (v7x 2 TCs)
    n_tiles = max(_cdiv(B, tile_b), 2 if B >= 2 * SUBLANE else 1)
    tile_rows = _round_up(_cdiv(B, n_tiles), SUBLANE)

    # --- VMEM budget: resident params (single or double buffered) + activations must fit
    vmem_limit = _default_vmem_limit()
    param_bytes = sum(a.size * a.dtype.itemsize for layer in prepared for a in layer)
    param_bytes *= (1 if single_buffer_params else 2)
    widest = max(out_pads)

    def _vmem_estimate(tb):
        x_bytes = 2 * tb * n_in * x.dtype.itemsize                        # double-buffered x tile
        act_bytes = 4 * tb * widest * 4                                   # generous temporaries
        o_bytes = 2 * tb * (sum(out_pads) if multiple_outputs else out_pads[-1]) * out_itemsize
        return param_bytes + x_bytes + act_bytes + o_bytes

    while tile_rows > SUBLANE and _vmem_estimate(tile_rows) > int(0.8 * vmem_limit):
        tile_rows = _round_up(tile_rows // 2, SUBLANE)
    TILE_B = tile_rows

    B_pad = _round_up(B, TILE_B)
    if B_pad != B:
        x = jnp.pad(x, ((0, B_pad - B), (0, 0)))          # row pad only; no lane pad of x
    grid = (B_pad // TILE_B,)

    flat_params = [a for layer in prepared for a in layer]

    in_specs = [pl.BlockSpec((TILE_B, n_in), lambda i: (i, 0))]
    for (w_p, b_p, g_p, be_p) in prepared:
        k_p, n_o_p = w_p.shape
        in_specs.append(_resident_spec((k_p, n_o_p), single_buffer_params))   # weight
        in_specs.append(_resident_spec((1, n_o_p), single_buffer_params))     # bias
        in_specs.append(_resident_spec((1, n_o_p), single_buffer_params))     # gamma
        in_specs.append(_resident_spec((1, n_o_p), single_buffer_params))     # beta

    if multiple_outputs:
        out_shape = tuple(jax.ShapeDtypeStruct((B_pad, p), out_dtype) for p in out_pads)
        out_specs = tuple(pl.BlockSpec((TILE_B, p), lambda i: (i, 0)) for p in out_pads)
        out_bytes = sum(B_pad * p * out_itemsize for p in out_pads)
    else:
        out_shape = jax.ShapeDtypeStruct((B_pad, out_pads[-1]), out_dtype)
        out_specs = pl.BlockSpec((TILE_B, out_pads[-1]), lambda i: (i, 0))
        out_bytes = B_pad * out_pads[-1] * out_itemsize

    # --- cost estimate for XLA's surrounding-op scheduling
    flops = 2 * B_pad * sum(w.shape[0] * w.shape[1] for (w, _, _, _) in prepared)
    transcendentals = B_pad * sum(out_pads) + B_pad * sum(norm_flags)       # tanh + rsqrt
    bytes_accessed = (x.size * x.dtype.itemsize
                      + sum(a.size * a.dtype.itemsize for a in flat_params)
                      + out_bytes)
    cost = pl.CostEstimate(flops=int(flops), transcendentals=int(transcendentals),
                           bytes_accessed=int(bytes_accessed))

    kernel = functools.partial(
        _mlp_fused_kernel,
        n_layers=n_layers,
        true_dims=true_dims,
        norm_flags=norm_flags,
        multiple_outputs=multiple_outputs,
        compute_dtype=compute_dtype,
    )

    out = pl.pallas_call(
        kernel,
        out_shape=out_shape,
        grid=grid,
        in_specs=in_specs,
        out_specs=out_specs,
        compiler_params=pltpu.CompilerParams(
            dimension_semantics=("parallel",),     # shard batch tiles across TCs (v7x)
            vmem_limit_bytes=vmem_limit,
        ),
        cost_estimate=cost,
    )(x, *flat_params)

    if multiple_outputs:
        return [o[:B, :true_dims[i]] for i, o in enumerate(out)]
    return out[:B, :true_dims[-1]]


# ----------------------------- references ----------------------------------

def mlp_reference_f32(x, params, norm_last_layer=True):
    """Pure-f32 JAX reference (exact PyTorch eval semantics)."""
    n_layers = len(params)
    a = x
    for i, (w, b, g, beta) in enumerate(params):
        h = a @ w + b
        act = jnp.tanh(h)
        if i < n_layers - 1 or norm_last_layer:
            mean = jnp.mean(act, axis=-1, keepdims=True)
            var = jnp.mean((act - mean) ** 2, axis=-1, keepdims=True)
            act = (act - mean) / jnp.sqrt(var + LN_EPS) * g + beta
        a = act
    return a


def mlp_reference_mixed(x, params, norm_last_layer=True, compute_dtype=jnp.float32):
    """Reference mirroring the kernel's mixed-precision path."""
    n_layers = len(params)
    a = x.astype(jnp.bfloat16)
    for i, (w, b, g, beta) in enumerate(params):
        h = jnp.dot(a, w.astype(jnp.bfloat16), preferred_element_type=jnp.float32) + b
        act = jnp.tanh(h.astype(compute_dtype))
        if i < n_layers - 1 or norm_last_layer:
            inv_n = jnp.float32(1.0 / w.shape[1])
            a32 = act.astype(jnp.float32)
            s = jnp.sum(a32, axis=-1, keepdims=True)
            ss = jnp.sum(a32 * a32, axis=-1, keepdims=True)
            mean = s * inv_n
            var = ss * inv_n - mean * mean
            inv_std = jax.lax.rsqrt(var + LN_EPS)
            act = (act - mean.astype(compute_dtype)) * inv_std.astype(compute_dtype)
            act = act * g.astype(compute_dtype) + beta.astype(compute_dtype)
        a = act.astype(jnp.bfloat16) if i + 1 < n_layers else act.astype(jnp.float32)
    return a


if __name__ == "__main__":
    key = jax.random.PRNGKey(0)
    batch = 8
    n_in, n_hidden, n_out = 32, [64, 48], 16

    key, kx = jax.random.split(key)
    x = jax.random.normal(kx, (batch, n_in), jnp.float32)

    params = init_mlp_params(key, n_in, n_out, n_hidden)
    prepared, true_dims = prepare_mlp_params(params)   # padded/cast ONCE (hoisted out of fwd)

    compute_dtype = _default_compute_dtype()
    single_buffer = True
    try:
        out = jax.block_until_ready(
            mlp_forward(x, prepared, true_dims,
                        compute_dtype=compute_dtype, single_buffer_params=single_buffer))
    except Exception:
        # Conservative fallback: double-buffered params, f32 elementwise (always lowers).
        compute_dtype, single_buffer = jnp.float32, False
        out = jax.block_until_ready(
            mlp_forward(x, prepared, true_dims,
                        compute_dtype=compute_dtype, single_buffer_params=single_buffer))

    assert out.shape == (batch, n_out), out.shape

    # Precision-matched reference (bf16 MXU inputs, f32 stats, same elementwise dtype).
    ref_mixed = mlp_reference_mixed(x, params, compute_dtype=compute_dtype)
    assert jnp.allclose(out, ref_mixed, atol=5e-2, rtol=5e-2), \
        float(jnp.max(jnp.abs(out - ref_mixed)))

    # Loose sanity check vs exact f32 PyTorch-semantics reference.
    ref_f32 = mlp_reference_f32(x, params)
    assert jnp.allclose(out, ref_f32, atol=0.2, rtol=0.0), \
        float(jnp.max(jnp.abs(out - ref_f32)))

    # multiple_outputs path (returns every intermediate activation).
    outs = mlp_forward(x, prepared, true_dims, multiple_outputs=True,
                       compute_dtype=compute_dtype, single_buffer_params=single_buffer)
    outs = jax.block_until_ready(outs)
    assert len(outs) == 3
    assert outs[0].shape == (batch, 64) and outs[1].shape == (batch, 48) \
        and outs[2].shape == (batch, n_out)
    assert jnp.allclose(outs[-1], out, atol=1e-6, rtol=1e-6)

    print("KERNEL_OK")
</pallas_src>

<mosaic_0001>
module attributes {stable_mosaic.version = 11 : i64} {
  func.func @_mlp_fused_kernel(%arg0: i32, %arg1: memref<8x32xf32, #tpu.memory_space<vmem>>, %arg2: memref<32x128xbf16, #tpu.memory_space<vmem>>, %arg3: memref<1x128xf32, #tpu.memory_space<vmem>>, %arg4: memref<1x128xf32, #tpu.memory_space<vmem>>, %arg5: memref<1x128xf32, #tpu.memory_space<vmem>>, %arg6: memref<128x128xbf16, #tpu.memory_space<vmem>>, %arg7: memref<1x128xf32, #tpu.memory_space<vmem>>, %arg8: memref<1x128xf32, #tpu.memory_space<vmem>>, %arg9: memref<1x128xf32, #tpu.memory_space<vmem>>, %arg10: memref<128x128xbf16, #tpu.memory_space<vmem>>, %arg11: memref<1x128xf32, #tpu.memory_space<vmem>>, %arg12: memref<1x128xf32, #tpu.memory_space<vmem>>, %arg13: memref<1x128xf32, #tpu.memory_space<vmem>>, %arg14: memref<8x128xf32, #tpu.memory_space<vmem>>) attributes {dimension_semantics = [#tpu.dimension_semantics<parallel>], iteration_bounds = array<i64: 1>, scalar_prefetch = 0 : i64, scratch_operands = 0 : i64, tpu.core_type = #tpu.core_type<tc>, window_params = [{transform_indices = @transform_0, window_bounds = array<i64: 8, 32>}, {pipeline_mode = #tpu.pipeline_mode<synchronous>, transform_indices = @transform_1, window_bounds = array<i64: 32, 128>}, {pipeline_mode = #tpu.pipeline_mode<synchronous>, transform_indices = @transform_2, window_bounds = array<i64: 1, 128>}, {pipeline_mode = #tpu.pipeline_mode<synchronous>, transform_indices = @transform_3, window_bounds = array<i64: 1, 128>}, {pipeline_mode = #tpu.pipeline_mode<synchronous>, transform_indices = @transform_4, window_bounds = array<i64: 1, 128>}, {pipeline_mode = #tpu.pipeline_mode<synchronous>, transform_indices = @transform_5, window_bounds = array<i64: 128, 128>}, {pipeline_mode = #tpu.pipeline_mode<synchronous>, transform_indices = @transform_6, window_bounds = array<i64: 1, 128>}, {pipeline_mode = #tpu.pipeline_mode<synchronous>, transform_indices = @transform_7, window_bounds = array<i64: 1, 128>}, {pipeline_mode = #tpu.pipeline_mode<synchronous>, transform_indices = @transform_8, window_bounds = array<i64: 1, 128>}, {pipeline_mode = #tpu.pipeline_mode<synchronous>, transform_indices = @transform_9, window_bounds = array<i64: 128, 128>}, {pipeline_mode = #tpu.pipeline_mode<synchronous>, transform_indices = @transform_10, window_bounds = array<i64: 1, 128>}, {pipeline_mode = #tpu.pipeline_mode<synchronous>, transform_indices = @transform_11, window_bounds = array<i64: 1, 128>}, {pipeline_mode = #tpu.pipeline_mode<synchronous>, transform_indices = @transform_12, window_bounds = array<i64: 1, 128>}, {transform_indices = @transform_13, window_bounds = array<i64: 8, 128>}]} {
    %c0 = arith.constant 0 : index
    %c0_0 = arith.constant 0 : index
    %0 = vector.load %arg1[%c0, %c0_0] : memref<8x32xf32, #tpu.memory_space<vmem>>, vector<8x32xf32>
    %1 = arith.truncf %0 : vector<8x32xf32> to vector<8x32xbf16>
    %c0_1 = arith.constant 0 : index
    %c0_2 = arith.constant 0 : index
    %2 = vector.load %arg2[%c0_1, %c0_2] : memref<32x128xbf16, #tpu.memory_space<vmem>>, vector<32x128xbf16>
    %cst = arith.constant dense<0.000000e+00> : vector<8x128xf32>
    %3 = tpu.matmul %1, %2, %cst {dimension_numbers = #tpu.dot_dimension_numbers<[1], [0], [0], [1], [0, 0, 1, 1], [], []>} : vector<8x32xbf16>, vector<32x128xbf16>, vector<8x128xf32> -> vector<8x128xf32>
    %c0_3 = arith.constant 0 : index
    %c0_4 = arith.constant 0 : index
    %4 = vector.load %arg3[%c0_3, %c0_4] : memref<1x128xf32, #tpu.memory_space<vmem>>, vector<1x128xf32>
    %5 = vector.broadcast %4 : vector<1x128xf32> to vector<8x128xf32>
    %6 = arith.addf %3, %5 : vector<8x128xf32>
    %7 = math.tanh %6 : vector<8x128xf32>
    %cst_5 = arith.constant dense<0.000000e+00> : vector<8xf32>
    %8 = vector.multi_reduction <add>, %7, %cst_5 [1] : vector<8x128xf32> to vector<8xf32>
    %9 = vector.shape_cast %8 : vector<8xf32> to vector<8x1xf32>
    %10 = arith.mulf %7, %7 : vector<8x128xf32>
    %cst_6 = arith.constant dense<0.000000e+00> : vector<8xf32>
    %11 = vector.multi_reduction <add>, %10, %cst_6 [1] : vector<8x128xf32> to vector<8xf32>
    %12 = vector.shape_cast %11 : vector<8xf32> to vector<8x1xf32>
    %cst_7 = arith.constant 1.562500e-02 : f32
    %13 = vector.broadcast %cst_7 : f32 to vector<8x1xf32>
    %14 = arith.mulf %9, %13 : vector<8x1xf32>
    %cst_8 = arith.constant 1.562500e-02 : f32
    %15 = vector.broadcast %cst_8 : f32 to vector<8x1xf32>
    %16 = arith.mulf %12, %15 : vector<8x1xf32>
    %17 = arith.mulf %14, %14 : vector<8x1xf32>
    %18 = arith.subf %16, %17 : vector<8x1xf32>
    %cst_9 = arith.constant 9.99999974E-6 : f32
    %19 = vector.broadcast %cst_9 : f32 to vector<8x1xf32>
    %20 = arith.addf %18, %19 : vector<8x1xf32>
    %21 = math.rsqrt %20 : vector<8x1xf32>
    %22 = vector.broadcast %14 : vector<8x1xf32> to vector<8x128xf32>
    %23 = arith.subf %7, %22 : vector<8x128xf32>
    %24 = vector.broadcast %21 : vector<8x1xf32> to vector<8x128xf32>
    %25 = arith.mulf %23, %24 : vector<8x128xf32>
    %c0_10 = arith.constant 0 : index
    %c0_11 = arith.constant 0 : index
    %26 = vector.load %arg4[%c0_10, %c0_11] : memref<1x128xf32, #tpu.memory_space<vmem>>, vector<1x128xf32>
    %27 = vector.broadcast %26 : vector<1x128xf32> to vector<8x128xf32>
    %28 = arith.mulf %25, %27 : vector<8x128xf32>
    %c0_12 = arith.constant 0 : index
    %c0_13 = arith.constant 0 : index
    %29 = vector.load %arg5[%c0_12, %c0_13] : memref<1x128xf32, #tpu.memory_space<vmem>>, vector<1x128xf32>
    %30 = vector.broadcast %29 : vector<1x128xf32> to vector<8x128xf32>
    %31 = arith.addf %28, %30 : vector<8x128xf32>
    %32 = arith.truncf %31 : vector<8x128xf32> to vector<8x128xbf16>
    %c0_14 = arith.constant 0 : index
    %c0_15 = arith.constant 0 : index
    %33 = vector.load %arg6[%c0_14, %c0_15] : memref<128x128xbf16, #tpu.memory_space<vmem>>, vector<128x128xbf16>
    %cst_16 = arith.constant dense<0.000000e+00> : vector<8x128xf32>
    %34 = tpu.matmul %32, %33, %cst_16 {dimension_numbers = #tpu.dot_dimension_numbers<[1], [0], [0], [1], [0, 0, 1, 1], [], []>} : vector<8x128xbf16>, vector<128x128xbf16>, vector<8x128xf32> -> vector<8x128xf32>
    %c0_17 = arith.constant 0 : index
    %c0_18 = arith.constant 0 : index
    %35 = vector.load %arg7[%c0_17, %c0_18] : memref<1x128xf32, #tpu.memory_space<vmem>>, vector<1x128xf32>
    %36 = vector.broadcast %35 : vector<1x128xf32> to vector<8x128xf32>
    %37 = arith.addf %34, %36 : vector<8x128xf32>
    %38 = math.tanh %37 : vector<8x128xf32>
    %cst_19 = arith.constant dense<0.000000e+00> : vector<8xf32>
    %39 = vector.multi_reduction <add>, %38, %cst_19 [1] : vector<8x128xf32> to vector<8xf32>
    %40 = vector.shape_cast %39 : vector<8xf32> to vector<8x1xf32>
    %41 = arith.mulf %38, %38 : vector<8x128xf32>
    %cst_20 = arith.constant dense<0.000000e+00> : vector<8xf32>
    %42 = vector.multi_reduction <add>, %41, %cst_20 [1] : vector<8x128xf32> to vector<8xf32>
    %43 = vector.shape_cast %42 : vector<8xf32> to vector<8x1xf32>
    %cst_21 = arith.constant 0.020833334 : f32
    %44 = vector.broadcast %cst_21 : f32 to vector<8x1xf32>
    %45 = arith.mulf %40, %44 : vector<8x1xf32>
    %cst_22 = arith.constant 0.020833334 : f32
    %46 = vector.broadcast %cst_22 : f32 to vector<8x1xf32>
    %47 = arith.mulf %43, %46 : vector<8x1xf32>
    %48 = arith.mulf %45, %45 : vector<8x1xf32>
    %49 = arith.subf %47, %48 : vector<8x1xf32>
    %cst_23 = arith.constant 9.99999974E-6 : f32
    %50 = vector.broadcast %cst_23 : f32 to vector<8x1xf32>
    %51 = arith.addf %49, %50 : vector<8x1xf32>
    %52 = math.rsqrt %51 : vector<8x1xf32>
    %53 = vector.broadcast %45 : vector<8x1xf32> to vector<8x128xf32>
    %54 = arith.subf %38, %53 : vector<8x128xf32>
    %55 = vector.broadcast %52 : vector<8x1xf32> to vector<8x128xf32>
    %56 = arith.mulf %54, %55 : vector<8x128xf32>
    %c0_24 = arith.constant 0 : index
    %c0_25 = arith.constant 0 : index
    %57 = vector.load %arg8[%c0_24, %c0_25] : memref<1x128xf32, #tpu.memory_space<vmem>>, vector<1x128xf32>
    %58 = vector.broadcast %57 : vector<1x128xf32> to vector<8x128xf32>
    %59 = arith.mulf %56, %58 : vector<8x128xf32>
    %c0_26 = arith.constant 0 : index
    %c0_27 = arith.constant 0 : index
    %60 = vector.load %arg9[%c0_26, %c0_27] : memref<1x128xf32, #tpu.memory_space<vmem>>, vector<1x128xf32>
    %61 = vector.broadcast %60 : vector<1x128xf32> to vector<8x128xf32>
    %62 = arith.addf %59, %61 : vector<8x128xf32>
    %63 = arith.truncf %62 : vector<8x128xf32> to vector<8x128xbf16>
    %c0_28 = arith.constant 0 : index
    %c0_29 = arith.constant 0 : index
    %64 = vector.load %arg10[%c0_28, %c0_29] : memref<128x128xbf16, #tpu.memory_space<vmem>>, vector<128x128xbf16>
    %cst_30 = arith.constant dense<0.000000e+00> : vector<8x128xf32>
    %65 = tpu.matmul %63, %64, %cst_30 {dimension_numbers = #tpu.dot_dimension_numbers<[1], [0], [0], [1], [0, 0, 1, 1], [], []>} : vector<8x128xbf16>, vector<128x128xbf16>, vector<8x128xf32> -> vector<8x128xf32>
    %c0_31 = arith.constant 0 : index
    %c0_32 = arith.constant 0 : index
    %66 = vector.load %arg11[%c0_31, %c0_32] : memref<1x128xf32, #tpu.memory_space<vmem>>, vector<1x128xf32>
    %67 = vector.broadcast %66 : vector<1x128xf32> to vector<8x128xf32>
    %68 = arith.addf %65, %67 : vector<8x128xf32>
    %69 = math.tanh %68 : vector<8x128xf32>
    %cst_33 = arith.constant dense<0.000000e+00> : vector<8xf32>
    %70 = vector.multi_reduction <add>, %69, %cst_33 [1] : vector<8x128xf32> to vector<8xf32>
    %71 = vector.shape_cast %70 : vector<8xf32> to vector<8x1xf32>
    %72 = arith.mulf %69, %69 : vector<8x128xf32>
    %cst_34 = arith.constant dense<0.000000e+00> : vector<8xf32>
    %73 = vector.multi_reduction <add>, %72, %cst_34 [1] : vector<8x128xf32> to vector<8xf32>
    %74 = vector.shape_cast %73 : vector<8xf32> to vector<8x1xf32>
    %cst_35 = arith.constant 6.250000e-02 : f32
    %75 = vector.broadcast %cst_35 : f32 to vector<8x1xf32>
    %76 = arith.mulf %71, %75 : vector<8x1xf32>
    %cst_36 = arith.constant 6.250000e-02 : f32
    %77 = vector.broadcast %cst_36 : f32 to vector<8x1xf32>
    %78 = arith.mulf %74, %77 : vector<8x1xf32>
    %79 = arith.mulf %76, %76 : vector<8x1xf32>
    %80 = arith.subf %78, %79 : vector<8x1xf32>
    %cst_37 = arith.constant 9.99999974E-6 : f32
    %81 = vector.broadcast %cst_37 : f32 to vector<8x1xf32>
    %82 = arith.addf %80, %81 : vector<8x1xf32>
    %83 = math.rsqrt %82 : vector<8x1xf32>
    %84 = vector.broadcast %76 : vector<8x1xf32> to vector<8x128xf32>
    %85 = arith.subf %69, %84 : vector<8x128xf32>
    %86 = vector.broadcast %83 : vector<8x1xf32> to vector<8x128xf32>
    %87 = arith.mulf %85, %86 : vector<8x128xf32>
    %c0_38 = arith.constant 0 : index
    %c0_39 = arith.constant 0 : index
    %88 = vector.load %arg12[%c0_38, %c0_39] : memref<1x128xf32, #tpu.memory_space<vmem>>, vector<1x128xf32>
    %89 = vector.broadcast %88 : vector<1x128xf32> to vector<8x128xf32>
    %90 = arith.mulf %87, %89 : vector<8x128xf32>
    %c0_40 = arith.constant 0 : index
    %c0_41 = arith.constant 0 : index
    %91 = vector.load %arg13[%c0_40, %c0_41] : memref<1x128xf32, #tpu.memory_space<vmem>>, vector<1x128xf32>
    %92 = vector.broadcast %91 : vector<1x128xf32> to vector<8x128xf32>
    %93 = arith.addf %90, %92 : vector<8x128xf32>
    %c0_42 = arith.constant 0 : index
    %c0_43 = arith.constant 0 : index
    %94 = vector.load %arg14[%c0_42, %c0_43] : memref<8x128xf32, #tpu.memory_space<vmem>>, vector<8x128xf32>
    tpu.vector_store %arg14[%c0_42, %c0_43], %93 {strides = array<i32>} : memref<8x128xf32, #tpu.memory_space<vmem>>, vector<8x128xf32>,
    return
  }
  func.func @transform_0(%arg0: i32) -> (i32, i32) {
    %c0_i32 = arith.constant 0 : i32
    %c0_i32_0 = arith.constant 0 : i32
    return %arg0, %c0_i32 : i32, i32
  }
  func.func @transform_1(%arg0: i32) -> (i32, i32) {
    %c0_i32 = arith.constant 0 : i32
    %c0_i32_0 = arith.constant 0 : i32
    %c0_i32_1 = arith.constant 0 : i32
    return %c0_i32, %c0_i32_0 : i32, i32
  }
  func.func @transform_2(%arg0: i32) -> (i32, i32) {
    %c0_i32 = arith.constant 0 : i32
    %c0_i32_0 = arith.constant 0 : i32
    %c0_i32_1 = arith.constant 0 : i32
    return %c0_i32, %c0_i32_0 : i32, i32
  }
  func.func @transform_3(%arg0: i32) -> (i32, i32) {
    %c0_i32 = arith.constant 0 : i32
    %c0_i32_0 = arith.constant 0 : i32
    %c0_i32_1 = arith.constant 0 : i32
    return %c0_i32, %c0_i32_0 : i32, i32
  }
  func.func @transform_4(%arg0: i32) -> (i32, i32) {
    %c0_i32 = arith.constant 0 : i32
    %c0_i32_0 = arith.constant 0 : i32
    %c0_i32_1 = arith.constant 0 : i32
    return %c0_i32, %c0_i32_0 : i32, i32
  }
  func.func @transform_5(%arg0: i32) -> (i32, i32) {
    %c0_i32 = arith.constant 0 : i32
    %c0_i32_0 = arith.constant 0 : i32
    %c0_i32_1 = arith.constant 0 : i32
    return %c0_i32, %c0_i32_0 : i32, i32
  }
  func.func @transform_6(%arg0: i32) -> (i32, i32) {
    %c0_i32 = arith.constant 0 : i32
    %c0_i32_0 = arith.constant 0 : i32
    %c0_i32_1 = arith.constant 0 : i32
    return %c0_i32, %c0_i32_0 : i32, i32
  }
  func.func @transform_7(%arg0: i32) -> (i32, i32) {
    %c0_i32 = arith.constant 0 : i32
    %c0_i32_0 = arith.constant 0 : i32
    %c0_i32_1 = arith.constant 0 : i32
    return %c0_i32, %c0_i32_0 : i32, i32
  }
  func.func @transform_8(%arg0: i32) -> (i32, i32) {
    %c0_i32 = arith.constant 0 : i32
    %c0_i32_0 = arith.constant 0 : i32
    %c0_i32_1 = arith.constant 0 : i32
    return %c0_i32, %c0_i32_0 : i32, i32
  }
  func.func @transform_9(%arg0: i32) -> (i32, i32) {
    %c0_i32 = arith.constant 0 : i32
    %c0_i32_0 = arith.constant 0 : i32
    %c0_i32_1 = arith.constant 0 : i32
    return %c0_i32, %c0_i32_0 : i32, i32
  }
  func.func @transform_10(%arg0: i32) -> (i32, i32) {
    %c0_i32 = arith.constant 0 : i32
    %c0_i32_0 = arith.constant 0 : i32
    %c0_i32_1 = arith.constant 0 : i32
    return %c0_i32, %c0_i32_0 : i32, i32
  }
  func.func @transform_11(%arg0: i32) -> (i32, i32) {
    %c0_i32 = arith.constant 0 : i32
    %c0_i32_0 = arith.constant 0 : i32
    %c0_i32_1 = arith.constant 0 : i32
    return %c0_i32, %c0_i32_0 : i32, i32
  }
  func.func @transform_12(%arg0: i32) -> (i32, i32) {
    %c0_i32 = arith.constant 0 : i32
    %c0_i32_0 = arith.constant 0 : i32
    %c0_i32_1 = arith.constant 0 : i32
    return %c0_i32, %c0_i32_0 : i32, i32
  }
  func.func @transform_13(%arg0: i32) -> (i32, i32) {
    %c0_i32 = arith.constant 0 : i32
    %c0_i32_0 = arith.constant 0 : i32
    return %arg0, %c0_i32 : i32, i32
  }
}

module attributes {stable_mosaic.version = 11 : i64} {
  func.func @_mlp_fused_kernel(%arg0: i32, %arg1: memref<8x32xf32, #tpu.memory_space<vmem>>, %arg2: memref<32x128xbf16, #tpu.memory_space<vmem>>, %arg3: memref<1x128xf32, #tpu.memory_space<vmem>>, %arg4: memref<1x128xf32, #tpu.memory_space<vmem>>, %arg5: memref<1x128xf32, #tpu.memory_space<vmem>>, %arg6: memref<128x128xbf16, #tpu.memory_space<vmem>>, %arg7: memref<1x128xf32, #tpu.memory_space<vmem>>, %arg8: memref<1x128xf32, #tpu.memory_space<vmem>>, %arg9: memref<1x128xf32, #tpu.memory_space<vmem>>, %arg10: memref<128x128xbf16, #tpu.memory_space<vmem>>, %arg11: memref<1x128xf32, #tpu.memory_space<vmem>>, %arg12: memref<1x128xf32, #tpu.memory_space<vmem>>, %arg13: memref<1x128xf32, #tpu.memory_space<vmem>>, %arg14: memref<8x128xf32, #tpu.memory_space<vmem>>) attributes {dimension_semantics = [#tpu.dimension_semantics<parallel>], iteration_bounds = array<i64: 1>, scalar_prefetch = 0 : i64, scratch_operands = 0 : i64, tpu.core_type = #tpu.core_type<tc>, window_params = [{transform_indices = @transform_0, window_bounds = array<i64: 8, 32>}, {pipeline_mode = #tpu.pipeline_mode<synchronous>, transform_indices = @transform_1, window_bounds = array<i64: 32, 128>}, {pipeline_mode = #tpu.pipeline_mode<synchronous>, transform_indices = @transform_2, window_bounds = array<i64: 1, 128>}, {pipeline_mode = #tpu.pipeline_mode<synchronous>, transform_indices = @transform_3, window_bounds = array<i64: 1, 128>}, {pipeline_mode = #tpu.pipeline_mode<synchronous>, transform_indices = @transform_4, window_bounds = array<i64: 1, 128>}, {pipeline_mode = #tpu.pipeline_mode<synchronous>, transform_indices = @transform_5, window_bounds = array<i64: 128, 128>}, {pipeline_mode = #tpu.pipeline_mode<synchronous>, transform_indices = @transform_6, window_bounds = array<i64: 1, 128>}, {pipeline_mode = #tpu.pipeline_mode<synchronous>, transform_indices = @transform_7, window_bounds = array<i64: 1, 128>}, {pipeline_mode = #tpu.pipeline_mode<synchronous>, transform_indices = @transform_8, window_bounds = array<i64: 1, 128>}, {pipeline_mode = #tpu.pipeline_mode<synchronous>, transform_indices = @transform_9, window_bounds = array<i64: 128, 128>}, {pipeline_mode = #tpu.pipeline_mode<synchronous>, transform_indices = @transform_10, window_bounds = array<i64: 1, 128>}, {pipeline_mode = #tpu.pipeline_mode<synchronous>, transform_indices = @transform_11, window_bounds = array<i64: 1, 128>}, {pipeline_mode = #tpu.pipeline_mode<synchronous>, transform_indices = @transform_12, window_bounds = array<i64: 1, 128>}, {transform_indices = @transform_13, window_bounds = array<i64: 8, 128>}]} {
    %c0 = arith.constant 0 : index
    %c0_0 = arith.constant 0 : index
    %0 = vector.load %arg1[%c0, %c0_0] : memref<8x32xf32, #tpu.memory_space<vmem>>, vector<8x32xf32>
    %1 = arith.truncf %0 : vector<8x32xf32> to vector<8x32xbf16>
    %c0_1 = arith.constant 0 : index
    %c0_2 = arith.constant 0 : index
    %2 = vector.load %arg2[%c0_1, %c0_2] : memref<32x128xbf16, #tpu.memory_space<vmem>>, vector<32x128xbf16>
    %cst = arith.constant dense<0.000000e+00> : vector<8x128xf32>
    %3 = tpu.matmul %1, %2, %cst {dimension_numbers = #tpu.dot_dimension_numbers<[1], [0], [0], [1], [0, 0, 1, 1], [], []>} : vector<8x32xbf16>, vector<32x128xbf16>, vector<8x128xf32> -> vector<8x128xf32>
    %c0_3 = arith.constant 0 : index
    %c0_4 = arith.constant 0 : index
    %4 = vector.load %arg3[%c0_3, %c0_4] : memref<1x128xf32, #tpu.memory_space<vmem>>, vector<1x128xf32>
    %5 = vector.broadcast %4 : vector<1x128xf32> to vector<8x128xf32>
    %6 = arith.addf %3, %5 : vector<8x128xf32>
    %7 = math.tanh %6 : vector<8x128xf32>
    %cst_5 = arith.constant dense<0.000000e+00> : vector<8xf32>
    %8 = vector.multi_reduction <add>, %7, %cst_5 [1] : vector<8x128xf32> to vector<8xf32>
    %9 = vector.shape_cast %8 : vector<8xf32> to vector<8x1xf32>
    %10 = arith.mulf %7, %7 : vector<8x128xf32>
    %cst_6 = arith.constant dense<0.000000e+00> : vector<8xf32>
    %11 = vector.multi_reduction <add>, %10, %cst_6 [1] : vector<8x128xf32> to vector<8xf32>
    %12 = vector.shape_cast %11 : vector<8xf32> to vector<8x1xf32>
    %cst_7 = arith.constant 1.562500e-02 : f32
    %13 = vector.broadcast %cst_7 : f32 to vector<8x1xf32>
    %14 = arith.mulf %9, %13 : vector<8x1xf32>
    %cst_8 = arith.constant 1.562500e-02 : f32
    %15 = vector.broadcast %cst_8 : f32 to vector<8x1xf32>
    %16 = arith.mulf %12, %15 : vector<8x1xf32>
    %17 = arith.mulf %14, %14 : vector<8x1xf32>
    %18 = arith.subf %16, %17 : vector<8x1xf32>
    %cst_9 = arith.constant 9.99999974E-6 : f32
    %19 = vector.broadcast %cst_9 : f32 to vector<8x1xf32>
    %20 = arith.addf %18, %19 : vector<8x1xf32>
    %21 = math.rsqrt %20 : vector<8x1xf32>
    %22 = vector.broadcast %14 : vector<8x1xf32> to vector<8x128xf32>
    %23 = arith.subf %7, %22 : vector<8x128xf32>
    %24 = vector.broadcast %21 : vector<8x1xf32> to vector<8x128xf32>
    %25 = arith.mulf %23, %24 : vector<8x128xf32>
    %c0_10 = arith.constant 0 : index
    %c0_11 = arith.constant 0 : index
    %26 = vector.load %arg4[%c0_10, %c0_11] : memref<1x128xf32, #tpu.memory_space<vmem>>, vector<1x128xf32>
    %27 = vector.broadcast %26 : vector<1x128xf32> to vector<8x128xf32>
    %28 = arith.mulf %25, %27 : vector<8x128xf32>
    %c0_12 = arith.constant 0 : index
    %c0_13 = arith.constant 0 : index
    %29 = vector.load %arg5[%c0_12, %c0_13] : memref<1x128xf32, #tpu.memory_space<vmem>>, vector<1x128xf32>
    %30 = vector.broadcast %29 : vector<1x128xf32> to vector<8x128xf32>
    %31 = arith.addf %28, %30 : vector<8x128xf32>
    %32 = arith.truncf %31 : vector<8x128xf32> to vector<8x128xbf16>
    %c0_14 = arith.constant 0 : index
    %c0_15 = arith.constant 0 : index
    %33 = vector.load %arg6[%c0_14, %c0_15] : memref<128x128xbf16, #tpu.memory_space<vmem>>, vector<128x128xbf16>
    %cst_16 = arith.constant dense<0.000000e+00> : vector<8x128xf32>
    %34 = tpu.matmul %32, %33, %cst_16 {dimension_numbers = #tpu.dot_dimension_numbers<[1], [0], [0], [1], [0, 0, 1, 1], [], []>} : vector<8x128xbf16>, vector<128x128xbf16>, vector<8x128xf32> -> vector<8x128xf32>
    %c0_17 = arith.constant 0 : index
    %c0_18 = arith.constant 0 : index
    %35 = vector.load %arg7[%c0_17, %c0_18] : memref<1x128xf32, #tpu.memory_space<vmem>>, vector<1x128xf32>
    %36 = vector.broadcast %35 : vector<1x128xf32> to vector<8x128xf32>
    %37 = arith.addf %34, %36 : vector<8x128xf32>
    %38 = math.tanh %37 : vector<8x128xf32>
    %cst_19 = arith.constant dense<0.000000e+00> : vector<8xf32>
    %39 = vector.multi_reduction <add>, %38, %cst_19 [1] : vector<8x128xf32> to vector<8xf32>
    %40 = vector.shape_cast %39 : vector<8xf32> to vector<8x1xf32>
    %41 = arith.mulf %38, %38 : vector<8x128xf32>
    %cst_20 = arith.constant dense<0.000000e+00> : vector<8xf32>
    %42 = vector.multi_reduction <add>, %41, %cst_20 [1] : vector<8x128xf32> to vector<8xf32>
    %43 = vector.shape_cast %42 : vector<8xf32> to vector<8x1xf32>
    %cst_21 = arith.constant 0.020833334 : f32
    %44 = vector.broadcast %cst_21 : f32 to vector<8x1xf32>
    %45 = arith.mulf %40, %44 : vector<8x1xf32>
    %cst_22 = arith.constant 0.020833334 : f32
    %46 = vector.broadcast %cst_22 : f32 to vector<8x1xf32>
    %47 = arith.mulf %43, %46 : vector<8x1xf32>
    %48 = arith.mulf %45, %45 : vector<8x1xf32>
    %49 = arith.subf %47, %48 : vector<8x1xf32>
    %cst_23 = arith.constant 9.99999974E-6 : f32
    %50 = vector.broadcast %cst_23 : f32 to vector<8x1xf32>
    %51 = arith.addf %49, %50 : vector<8x1xf32>
    %52 = math.rsqrt %51 : vector<8x1xf32>
    %53 = vector.broadcast %45 : vector<8x1xf32> to vector<8x128xf32>
    %54 = arith.subf %38, %53 : vector<8x128xf32>
    %55 = vector.broadcast %52 : vector<8x1xf32> to vector<8x128xf32>
    %56 = arith.mulf %54, %55 : vector<8x128xf32>
    %c0_24 = arith.constant 0 : index
    %c0_25 = arith.constant 0 : index
    %57 = vector.load %arg8[%c0_24, %c0_25] : memref<1x128xf32, #tpu.memory_space<vmem>>, vector<1x128xf32>
    %58 = vector.broadcast %57 : vector<1x128xf32> to vector<8x128xf32>
    %59 = arith.mulf %56, %58 : vector<8x128xf32>
    %c0_26 = arith.constant 0 : index
    %c0_27 = arith.constant 0 : index
    %60 = vector.load %arg9[%c0_26, %c0_27] : memref<1x128xf32, #tpu.memory_space<vmem>>, vector<1x128xf32>
    %61 = vector.broadcast %60 : vector<1x128xf32> to vector<8x128xf32>
    %62 = arith.addf %59, %61 : vector<8x128xf32>
    %63 = arith.truncf %62 : vector<8x128xf32> to vector<8x128xbf16>
    %c0_28 = arith.constant 0 : index
    %c0_29 = arith.constant 0 : index
    %64 = vector.load %arg10[%c0_28, %c0_29] : memref<128x128xbf16, #tpu.memory_space<vmem>>, vector<128x128xbf16>
    %cst_30 = arith.constant dense<0.000000e+00> : vector<8x128xf32>
    %65 = tpu.matmul %63, %64, %cst_30 {dimension_numbers = #tpu.dot_dimension_numbers<[1], [0], [0], [1], [0, 0, 1, 1], [], []>} : vector<8x128xbf16>, vector<128x128xbf16>, vector<8x128xf32> -> vector<8x128xf32>
    %c0_31 = arith.constant 0 : index
    %c0_32 = arith.constant 0 : index
    %66 = vector.load %arg11[%c0_31, %c0_32] : memref<1x128xf32, #tpu.memory_space<vmem>>, vector<1x128xf32>
    %67 = vector.broadcast %66 : vector<1x128xf32> to vector<8x128xf32>
    %68 = arith.addf %65, %67 : vector<8x128xf32>
    %69 = math.tanh %68 : vector<8x128xf32>
    %cst_33 = arith.constant dense<0.000000e+00> : vector<8xf32>
    %70 = vector.multi_reduction <add>, %69, %cst_33 [1] : vector<8x128xf32> to vector<8xf32>
    %71 = vector.shape_cast %70 : vector<8xf32> to vector<8x1xf32>
    %72 = arith.mulf %69, %69 : vector<8x128xf32>
    %cst_34 = arith.constant dense<0.000000e+00> : vector<8xf32>
    %73 = vector.multi_reduction <add>, %72, %cst_34 [1] : vector<8x128xf32> to vector<8xf32>
    %74 = vector.shape_cast %73 : vector<8xf32> to vector<8x1xf32>
    %cst_35 = arith.constant 6.250000e-02 : f32
    %75 = vector.broadcast %cst_35 : f32 to vector<8x1xf32>
    %76 = arith.mulf %71, %75 : vector<8x1xf32>
    %cst_36 = arith.constant 6.250000e-02 : f32
    %77 = vector.broadcast %cst_36 : f32 to vector<8x1xf32>
    %78 = arith.mulf %74, %77 : vector<8x1xf32>
    %79 = arith.mulf %76, %76 : vector<8x1xf32>
    %80 = arith.subf %78, %79 : vector<8x1xf32>
    %cst_37 = arith.constant 9.99999974E-6 : f32
    %81 = vector.broadcast %cst_37 : f32 to vector<8x1xf32>
    %82 = arith.addf %80, %81 : vector<8x1xf32>
    %83 = math.rsqrt %82 : vector<8x1xf32>
    %84 = vector.broadcast %76 : vector<8x1xf32> to vector<8x128xf32>
    %85 = arith.subf %69, %84 : vector<8x128xf32>
    %86 = vector.broadcast %83 : vector<8x1xf32> to vector<8x128xf32>
    %87 = arith.mulf %85, %86 : vector<8x128xf32>
    %c0_38 = arith.constant 0 : index
    %c0_39 = arith.constant 0 : index
    %88 = vector.load %arg12[%c0_38, %c0_39] : memref<1x128xf32, #tpu.memory_space<vmem>>, vector<1x128xf32>
    %89 = vector.broadcast %88 : vector<1x128xf32> to vector<8x128xf32>
    %90 = arith.mulf %87, %89 : vector<8x128xf32>
    %c0_40 = arith.constant 0 : index
    %c0_41 = arith.constant 0 : index
    %91 = vector.load %arg13[%c0_40, %c0_41] : memref<1x128xf32, #tpu.memory_space<vmem>>, vector<1x128xf32>
    %92 = vector.broadcast %91 : vector<1x128xf32> to vector<8x128xf32>
    %93 = arith.addf %90, %92 : vector<8x128xf32>
    %c0_42 = arith.constant 0 : index
    %c0_43 = arith.constant 0 : index
    %94 = vector.load %arg14[%c0_42, %c0_43] : memref<8x128xf32, #tpu.memory_space<vmem>>, vector<8x128xf32>
    tpu.vector_store %arg14[%c0_42, %c0_43], %93 {strides = array<i32>} : memref<8x128xf32, #tpu.memory_space<vmem>>, vector<8x128xf32>,
    return
  }
  func.func @transform_0(%arg0: i32) -> (i32, i32) {
    %c0_i32 = arith.constant 0 : i32
    %c0_i32_0 = arith.constant 0 : i32
    return %arg0, %c0_i32 : i32, i32
  }
  func.func @transform_1(%arg0: i32) -> (i32, i32) {
    %c0_i32 = arith.constant 0 : i32
    %c0_i32_0 = arith.constant 0 : i32
    %c0_i32_1 = arith.constant 0 : i32
    return %c0_i32, %c0_i32_0 : i32, i32
  }
  func.func @transform_2(%arg0: i32) -> (i32, i32) {
    %c0_i32 = arith.constant 0 : i32
    %c0_i32_0 = arith.constant 0 : i32
    %c0_i32_1 = arith.constant 0 : i32
    return %c0_i32, %c0_i32_0 : i32, i32
  }
  func.func @transform_3(%arg0: i32) -> (i32, i32) {
    %c0_i32 = arith.constant 0 : i32
    %c0_i32_0 = arith.constant 0 : i32
    %c0_i32_1 = arith.constant 0 : i32
    return %c0_i32, %c0_i32_0 : i32, i32
  }
  func.func @transform_4(%arg0: i32) -> (i32, i32) {
    %c0_i32 = arith.constant 0 : i32
    %c0_i32_0 = arith.constant 0 : i32
    %c0_i32_1 = arith.constant 0 : i32
    return %c0_i32, %c0_i32_0 : i32, i32
  }
  func.func @transform_5(%arg0: i32) -> (i32, i32) {
    %c0_i32 = arith.constant 0 : i32
    %c0_i32_0 = arith.constant 0 : i32
    %c0_i32_1 = arith.constant 0 : i32
    return %c0_i32, %c0_i32_0 : i32, i32
  }
  func.func @transform_6(%arg0: i32) -> (i32, i32) {
    %c0_i32 = arith.constant 0 : i32
    %c0_i32_0 = arith.constant 0 : i32
    %c0_i32_1 = arith.constant 0 : i32
    return %c0_i32, %c0_i32_0 : i32, i32
  }
  func.func @transform_7(%arg0: i32) -> (i32, i32) {
    %c0_i32 = arith.constant 0 : i32
    %c0_i32_0 = arith.constant 0 : i32
    %c0_i32_1 = arith.constant 0 : i32
    return %c0_i32, %c0_i32_0 : i32, i32
  }
  func.func @transform_8(%arg0: i32) -> (i32, i32) {
    %c0_i32 = arith.constant 0 : i32
    %c0_i32_0 = arith.constant 0 : i32
    %c0_i32_1 = arith.constant 0 : i32
    return %c0_i32, %c0_i32_0 : i32, i32
  }
  func.func @transform_9(%arg0: i32) -> (i32, i32) {
    %c0_i32 = arith.constant 0 : i32
    %c0_i32_0 = arith.constant 0 : i32
    %c0_i32_1 = arith.constant 0 : i32
    return %c0_i32, %c0_i32_0 : i32, i32
  }
  func.func @transform_10(%arg0: i32) -> (i32, i32) {
    %c0_i32 = arith.constant 0 : i32
    %c0_i32_0 = arith.constant 0 : i32
    %c0_i32_1 = arith.constant 0 : i32
    return %c0_i32, %c0_i32_0 : i32, i32
  }
  func.func @transform_11(%arg0: i32) -> (i32, i32) {
    %c0_i32 = arith.constant 0 : i32
    %c0_i32_0 = arith.constant 0 : i32
    %c0_i32_1 = arith.constant 0 : i32
    return %c0_i32, %c0_i32_0 : i32, i32
  }
  func.func @transform_12(%arg0: i32) -> (i32, i32) {
    %c0_i32 = arith.constant 0 : i32
    %c0_i32_0 = arith.constant 0 : i32
    %c0_i32_1 = arith.constant 0 : i32
    return %c0_i32, %c0_i32_0 : i32, i32
  }
  func.func @transform_13(%arg0: i32) -> (i32, i32) {
    %c0_i32 = arith.constant 0 : i32
    %c0_i32_0 = arith.constant 0 : i32
    return %arg0, %c0_i32 : i32, i32
  }
}

</mosaic_0001>

<llo_original>
// kernel: tpu_custom_call.1
$region0: #{tpu_custom_call.1}
  #allocation0 [shape = 'u32[]', space=smem, size = 0x4, offset = 0x4, fixed_abs, tag = 'smem constant byte address 0x4 - core index']
  #allocation1 [shape = 'u32[72,128]{1,0:T(1,128)}', space=vmem, size = 0x9000, scoped, tag = 'internal scratch']
  %s0 = inlined_call_operand.hbm [shape: f32[8,32], index: 0, kind: input, shape index: {}]
  %s1 = inlined_call_operand.hbm [shape: bf16[32,128], index: 1, kind: input, shape index: {}]
  %s2 = inlined_call_operand.vmem [shape: f32[1,128], index: 2, kind: input, shape index: {}]
  %s3 = inlined_call_operand.vmem [shape: f32[1,128], index: 3, kind: input, shape index: {}]
  %s4 = inlined_call_operand.vmem [shape: f32[1,128], index: 4, kind: input, shape index: {}]
  %s5 = inlined_call_operand.hbm [shape: bf16[128,128], index: 5, kind: input, shape index: {}]
  %s6 = inlined_call_operand.vmem [shape: f32[1,128], index: 6, kind: input, shape index: {}]
  %s7 = inlined_call_operand.vmem [shape: f32[1,128], index: 7, kind: input, shape index: {}]
  %s8 = inlined_call_operand.vmem [shape: f32[1,128], index: 8, kind: input, shape index: {}]
  %s9 = inlined_call_operand.hbm [shape: bf16[128,128], index: 9, kind: input, shape index: {}]
  %s10 = inlined_call_operand.vmem [shape: f32[1,128], index: 10, kind: input, shape index: {}]
  %s11 = inlined_call_operand.vmem [shape: f32[1,128], index: 11, kind: input, shape index: {}]
  %s12 = inlined_call_operand.vmem [shape: f32[1,128], index: 12, kind: input, shape index: {}]
  %s13 = inlined_call_operand.hbm [shape: f32[8,128], index: 13, kind: output, shape index: {}]
  %s14 = sld [smem:[#allocation0]]
  $region78: #{tpu_custom_call.1} parent=0
    _
  %s16 = ssub.s32 1, %s14
  %s17 = scalar_select 0, %s16, %s14
  $region1: #{tpu_custom_call.1} parent=0
    #allocation2 [shape = 'u8[4096]{0}', space=vmem, size = 0x1000, scoped, tag = 'input window, operand 0, single buffered']
    #allocation3 [shape = 's32[1]{0}', space=sflag, size = 0x4, scoped, tag = 'scoped memory for tpu_custom_call.1']
    #allocation4 [shape = 's32[1]{0}', space=sflag, size = 0x4, scoped, tag = 'scoped memory for tpu_custom_call.1']
    #allocation5 [shape = 'u8[8192]{0}', space=vmem, size = 0x2000, scoped, tag = 'input window, operand 1, single buffered']
    #allocation6 [shape = 's32[1]{0}', space=sflag, size = 0x4, scoped, tag = 'scoped memory for tpu_custom_call.1']
    #allocation7 [shape = 'u8[32768]{0}', space=vmem, size = 0x8000, scoped, tag = 'input window, operand 5, single buffered']
    #allocation8 [shape = 'u8[32768]{0}', space=vmem, size = 0x8000, scoped, tag = 'input window, operand 9, single buffered']
    #allocation9 [shape = 's32[1]{0}', space=sflag, size = 0x4, scoped, tag = 'scoped memory for tpu_custom_call.1']
    #allocation10 [shape = 'u8[4096]{0}', space=vmem, size = 0x1000, scoped, tag = 'output window, operand 0, single buffered']
    %18 = vsyncpa [#allocation3], 0
    %19 = vsyncpa [#allocation6], 0
    %20 = vsyncpa [#allocation9], 0
    %21 = vsyncpa [#allocation4], 0
    // Predicated region
    $region2: #{tpu_custom_call.1} parent=1 // pred_check
      _
    $region3: #{tpu_custom_call.1} parent=1 // pred_check_branch
      %23 = sbr.rel (0) target = $region5
    $region4: #{tpu_custom_call.1} parent=1 // pred_region
      %25 = vsyncadd [#allocation3], 0
      %s27 = sshll.u32 %s0, 4
      %s28 = int_to_ptr.hbm [resolvable:$true] %s27
      %s29 = sshll.u32 [#allocation2], 4
      %s30 = int_to_ptr.vmem [resolvable:$true] %s29
      %32 = dma.hbm_to_vmem [thread:$0]  %s28, 128, %s30, [#allocation3]
    $region5: #{tpu_custom_call.1} parent=1 // pred_fallthru
      _
    // Predicated region
    $region6: #{tpu_custom_call.1} parent=1 // pred_check
      _
    $region7: #{tpu_custom_call.1} parent=1 // pred_check_branch
      %34 = sbr.rel (0) target = $region9
    $region8: #{tpu_custom_call.1} parent=1 // pred_region
      %36 = vsyncadd [#allocation6], 0
      %s37 = sshll.u32 %s1, 4
      %s38 = int_to_ptr.hbm [resolvable:$true] %s37
      %s39 = sshll.u32 [#allocation5], 4
      %s40 = int_to_ptr.vmem [resolvable:$true] %s39
      %45 = dma.hbm_to_vmem [thread:$0]  %s38, 256, %s40, [#allocation6], 64, 64, 4
    $region9: #{tpu_custom_call.1} parent=1 // pred_fallthru
      _
    // Predicated region
    $region10: #{tpu_custom_call.1} parent=1 // pred_check
      _
    $region11: #{tpu_custom_call.1} parent=1 // pred_check_branch
      %47 = sbr.rel (0) target = $region13
    $region12: #{tpu_custom_call.1} parent=1 // pred_region
      _
    $region13: #{tpu_custom_call.1} parent=1 // pred_fallthru
      _
    // Predicated region
    $region14: #{tpu_custom_call.1} parent=1 // pred_check
      _
    $region15: #{tpu_custom_call.1} parent=1 // pred_check_branch
      %49 = sbr.rel (0) target = $region17
    $region16: #{tpu_custom_call.1} parent=1 // pred_region
      _
    $region17: #{tpu_custom_call.1} parent=1 // pred_fallthru
      _
    // Predicated region
    $region18: #{tpu_custom_call.1} parent=1 // pred_check
      _
    $region19: #{tpu_custom_call.1} parent=1 // pred_check_branch
      %51 = sbr.rel (0) target = $region21
    $region20: #{tpu_custom_call.1} parent=1 // pred_region
      _
    $region21: #{tpu_custom_call.1} parent=1 // pred_fallthru
      _
    // Predicated region
    $region22: #{tpu_custom_call.1} parent=1 // pred_check
      _
    $region23: #{tpu_custom_call.1} parent=1 // pred_check_branch
      %53 = sbr.rel (0) target = $region25
    $region24: #{tpu_custom_call.1} parent=1 // pred_region
      %55 = vsyncadd [#allocation6], 0
      %s56 = sshll.u32 %s5, 4
      %s57 = int_to_ptr.hbm [resolvable:$true] %s56
      %s58 = sshll.u32 [#allocation7], 4
      %s59 = int_to_ptr.vmem [resolvable:$true] %s58
      %64 = dma.hbm_to_vmem [thread:$0]  %s57, 1024, %s59, [#allocation6], 64, 64, 4
    $region25: #{tpu_custom_call.1} parent=1 // pred_fallthru
      _
    // Predicated region
    $region26: #{tpu_custom_call.1} parent=1 // pred_check
      _
    $region27: #{tpu_custom_call.1} parent=1 // pred_check_branch
      %66 = sbr.rel (0) target = $region29
    $region28: #{tpu_custom_call.1} parent=1 // pred_region
      _
    $region29: #{tpu_custom_call.1} parent=1 // pred_fallthru
      _
    // Predicated region
    $region30: #{tpu_custom_call.1} parent=1 // pred_check
      _
    $region31: #{tpu_custom_call.1} parent=1 // pred_check_branch
      %68 = sbr.rel (0) target = $region33
    $region32: #{tpu_custom_call.1} parent=1 // pred_region
      _
    $region33: #{tpu_custom_call.1} parent=1 // pred_fallthru
      _
    // Predicated region
    $region34: #{tpu_custom_call.1} parent=1 // pred_check
      _
    $region35: #{tpu_custom_call.1} parent=1 // pred_check_branch
      %70 = sbr.rel (0) target = $region37
    $region36: #{tpu_custom_call.1} parent=1 // pred_region
      _
    $region37: #{tpu_custom_call.1} parent=1 // pred_fallthru
      _
    // Predicated region
    $region38: #{tpu_custom_call.1} parent=1 // pred_check
      _
    $region39: #{tpu_custom_call.1} parent=1 // pred_check_branch
      %72 = sbr.rel (0) target = $region41
    $region40: #{tpu_custom_call.1} parent=1 // pred_region
      %74 = vsyncadd [#allocation9], 0
      %s75 = sshll.u32 %s9, 4
      %s76 = int_to_ptr.hbm [resolvable:$true] %s75
      %s77 = sshll.u32 [#allocation8], 4
      %s78 = int_to_ptr.vmem [resolvable:$true] %s77
      %83 = dma.hbm_to_vmem [thread:$0]  %s76, 1024, %s78, [#allocation9], 64, 64, 4
    $region41: #{tpu_custom_call.1} parent=1 // pred_fallthru
      _
    // Predicated region
    $region42: #{tpu_custom_call.1} parent=1 // pred_check
      _
    $region43: #{tpu_custom_call.1} parent=1 // pred_check_branch
      %85 = sbr.rel (0) target = $region45
    $region44: #{tpu_custom_call.1} parent=1 // pred_region
      _
    $region45: #{tpu_custom_call.1} parent=1 // pred_fallthru
      _
    // Predicated region
    $region46: #{tpu_custom_call.1} parent=1 // pred_check
      _
    $region47: #{tpu_custom_call.1} parent=1 // pred_check_branch
      %87 = sbr.rel (0) target = $region49
    $region48: #{tpu_custom_call.1} parent=1 // pred_region
      _
    $region49: #{tpu_custom_call.1} parent=1 // pred_fallthru
      _
    // Predicated region
    $region50: #{tpu_custom_call.1} parent=1 // pred_check
      _
    $region51: #{tpu_custom_call.1} parent=1 // pred_check_branch
      %89 = sbr.rel (0) target = $region53
    $region52: #{tpu_custom_call.1} parent=1 // pred_region
      _
    $region53: #{tpu_custom_call.1} parent=1 // pred_fallthru
      _
    // Predicated region
    $region54: #{tpu_custom_call.1} parent=1 // pred_check
      _
    $region55: #{tpu_custom_call.1} parent=1 // pred_check_branch
      %91 = sbr.rel (0) target = $region57
    $region56: #{tpu_custom_call.1} parent=1 // pred_region
      %93 = dma.done [#allocation3], 128
    $region57: #{tpu_custom_call.1} parent=1 // pred_fallthru
      _
    // Predicated region
    $region58: #{tpu_custom_call.1} parent=1 // pred_check
      _
    $region59: #{tpu_custom_call.1} parent=1 // pred_check_branch
      %95 = sbr.rel (0) target = $region61
    $region60: #{tpu_custom_call.1} parent=1 // pred_region
      %97 = dma.done [#allocation6], 256
    $region61: #{tpu_custom_call.1} parent=1 // pred_fallthru
      _
    // Predicated region
    $region62: #{tpu_custom_call.1} parent=1 // pred_check
      _
    $region63: #{tpu_custom_call.1} parent=1 // pred_check_branch
      %99 = sbr.rel (0) target = $region65
    $region64: #{tpu_custom_call.1} parent=1 // pred_region
      %101 = dma.done [#allocation6], 1024
    $region65: #{tpu_custom_call.1} parent=1 // pred_fallthru
      _
    // Predicated region
    $region66: #{tpu_custom_call.1} parent=1 // pred_check
      _
    $region67: #{tpu_custom_call.1} parent=1 // pred_check_branch
      %103 = sbr.rel (0) target = $region69
    $region68: #{tpu_custom_call.1} parent=1 // pred_region
      %105 = dma.done [#allocation9], 1024
    $region69: #{tpu_custom_call.1} parent=1 // pred_fallthru
      _
    %v107 = vld [vmem:[#allocation2] sm:$0xff]
    %v108 = vpack.c.bf16 %v107, %v107
    %v109 = vld [vmem:[#allocation5] sm:$0xf]
    %v110 = vld [vmem:[#allocation5 + $0x4] sm:$0xf]
    %v111 = vld [vmem:[#allocation5 + $0x8] sm:$0xf]
    %v112 = vld [vmem:[#allocation5 + $0xc] sm:$0xf]
    %v113 = vld [vmem:[%s2] sm:$0x1]
    %v115 = vperm.slane %v113, 0
    %v121 = vunpack.c.l.b16 %v109
    %v122 = vunpack.c.l.b16 %v110
    %v123 = vunpack.c.l.b16 %v111
    %v124 = vunpack.c.l.b16 %v112
    %v125 = vpack.c.b16 %v122, %v121
    %v126 = vpack.c.b16 %v124, %v123
    %vm129 = vcmask 261120
    %v131 = vsel %vm129, %v108, 0
    %133 = vmatpush.bf16.msra.mxu0 0
    %134 = vmatpush.bf16.msra.mxu0 0
    %135 = vmatpush.bf16.msra.mxu0 0
    %136 = vmatpush.bf16.msra.mxu0 0
    %137 = vmatpush.bf16.msra.mxu0 0
    %138 = vmatpush.bf16.msra.mxu0 0
    %139 = vmatpush.bf16.msra.mxu0 %v126
    %140 = vmatpush.bf16.msra.mxu0 %v125
    %141 = vmatmul.bf16.gmra.mxu0 %v131
    %v142 = vpop.f32.mrf.mxu0
    %v143 = vadd.f32 %v115, %v142
    %v144 = vpop.f32.mrf.mxu0
    %145 = vdwg.mxu0
    %v146 = vtanh.pop %v143
    %147 = vadd.xlane.f32.xlu0 %v146
    %v148 = vpop.xlane.xlu0 %147
    %v149 = vmul.f32 %v146, %v146
    %150 = vadd.xlane.f32.xlu0 %v149
    %v151 = vpop.xlane.xlu0 %150
    %v152 = vmul.f32 %v148, 0.015625
    %v153 = vmul.f32 %v151, 0.015625
    %v154 = vmul.f32 %v152, %v152
    %v155 = vsub.f32 %v153, %v154
    %v156 = vadd.f32 %v155, 1e-05
    %v157 = vrsqrt.pop %v156
    %v158 = vmul.f32 %v157, %v156
    %v159 = vmul.f32 %v158, %v157
    %v160 = vmul.f32 0.5, %v159
    %v161 = vsub.f32 1.5, %v160
    %v162 = vmul.f32 %v157, %v161
    %vm163 = vweird.f32 %v156
    %vm164 = vweird.f32 %v157
    %vm165 = vmor %vm163, %vm164
    %v166 = vsel %vm165, %v157, %v162
    %v167 = vsub.f32 %v146, %v152
    %v168 = vmul.f32 %v167, %v166
    %v169 = vld [vmem:[%s3] sm:$0x1]
    %v171 = vperm.slane %v169, 0
    %v173 = vmul.f32 %v168, %v171
    %v174 = vld [vmem:[%s4] sm:$0x1]
    %v176 = vperm.slane %v174, 0
    %v178 = vadd.f32 %v173, %v176
    %v179 = vpack.c.bf16 %v178, %v178
    %v180 = vld [vmem:[#allocation7] sm:$0xf]
    %v181 = vld [vmem:[#allocation7 + $0x4] sm:$0xf]
    %v182 = vld [vmem:[#allocation7 + $0x8] sm:$0xf]
    %v183 = vld [vmem:[#allocation7 + $0xc] sm:$0xf]
    %v184 = vld [vmem:[#allocation7 + $0x10] sm:$0xf]
    %v185 = vld [vmem:[#allocation7 + $0x14] sm:$0xf]
    %v186 = vld [vmem:[#allocation7 + $0x18] sm:$0xf]
    %v187 = vld [vmem:[#allocation7 + $0x1c] sm:$0xf]
    %v188 = vld [vmem:[#allocation7 + $0x20] sm:$0xf]
    %v189 = vld [vmem:[#allocation7 + $0x24] sm:$0xf]
    %v190 = vld [vmem:[#allocation7 + $0x28] sm:$0xf]
    %v191 = vld [vmem:[#allocation7 + $0x2c] sm:$0xf]
    %v192 = vld [vmem:[#allocation7 + $0x30] sm:$0xf]
    %v193 = vld [vmem:[#allocation7 + $0x34] sm:$0xf]
    %v194 = vld [vmem:[#allocation7 + $0x38] sm:$0xf]
    %v195 = vld [vmem:[#allocation7 + $0x3c] sm:$0xf]
    %v196 = vld [vmem:[%s6] sm:$0x1]
    %v198 = vperm.slane %v196, 0
    %v216 = vunpack.c.l.b16 %v180
    %v217 = vunpack.c.l.b16 %v181
    %v218 = vunpack.c.l.b16 %v182
    %v219 = vunpack.c.l.b16 %v183
    %v220 = vunpack.c.l.b16 %v184
    %v221 = vunpack.c.l.b16 %v185
    %v222 = vunpack.c.l.b16 %v186
    %v223 = vunpack.c.l.b16 %v187
    %v224 = vunpack.c.l.b16 %v188
    %v225 = vunpack.c.l.b16 %v189
    %v226 = vunpack.c.l.b16 %v190
    %v227 = vunpack.c.l.b16 %v191
    %v228 = vunpack.c.l.b16 %v192
    %v229 = vunpack.c.l.b16 %v193
    %v230 = vunpack.c.l.b16 %v194
    %v231 = vunpack.c.l.b16 %v195
    %v232 = vpack.c.b16 %v217, %v216
    %v233 = vpack.c.b16 %v219, %v218
    %v234 = vpack.c.b16 %v221, %v220
    %v235 = vpack.c.b16 %v223, %v222
    %v236 = vpack.c.b16 %v225, %v224
    %v237 = vpack.c.b16 %v227, %v226
    %v238 = vpack.c.b16 %v229, %v228
    %v239 = vpack.c.b16 %v231, %v230
    %248 = vmatpush.bf16.msra.mxu0 %v239
    %249 = vmatpush.bf16.msra.mxu0 %v238
    %250 = vmatpush.bf16.msra.mxu0 %v237
    %251 = vmatpush.bf16.msra.mxu0 %v236
    %252 = vmatpush.bf16.msra.mxu0 %v235
    %253 = vmatpush.bf16.msra.mxu0 %v234
    %254 = vmatpush.bf16.msra.mxu0 %v233
    %255 = vmatpush.bf16.msra.mxu0 %v232
    %256 = vmatmul.bf16.gmra.mxu0 %v179
    %v257 = vpop.f32.mrf.mxu0
    %v258 = vadd.f32 %v198, %v257
    %v259 = vpop.f32.mrf.mxu0
    %260 = vdwg.mxu0
    %v261 = vtanh.pop %v258
    %262 = vadd.xlane.f32.xlu0 %v261
    %v263 = vpop.xlane.xlu0 %262
    %v264 = vmul.f32 %v261, %v261
    %265 = vadd.xlane.f32.xlu0 %v264
    %v266 = vpop.xlane.xlu0 %265
    %v267 = vmul.f32 %v263, 0.020833334
    %v268 = vmul.f32 %v266, 0.020833334
    %v269 = vmul.f32 %v267, %v267
    %v270 = vsub.f32 %v268, %v269
    %v271 = vadd.f32 %v270, 1e-05
    %v272 = vrsqrt.pop %v271
    %v273 = vmul.f32 %v272, %v271
    %v274 = vmul.f32 %v273, %v272
    %v275 = vmul.f32 0.5, %v274
    %v276 = vsub.f32 1.5, %v275
    %v277 = vmul.f32 %v272, %v276
    %vm278 = vweird.f32 %v271
    %vm279 = vweird.f32 %v272
    %vm280 = vmor %vm278, %vm279
    %v281 = vsel %vm280, %v272, %v277
    %v282 = vsub.f32 %v261, %v267
    %v283 = vmul.f32 %v282, %v281
    %v284 = vld [vmem:[%s7] sm:$0x1]
    %v286 = vperm.slane %v284, 0
    %v288 = vmul.f32 %v283, %v286
    %v289 = vld [vmem:[%s8] sm:$0x1]
    %v291 = vperm.slane %v289, 0
    %v293 = vadd.f32 %v288, %v291
    %v294 = vpack.c.bf16 %v293, %v293
    %v295 = vld [vmem:[#allocation8] sm:$0xf]
    %v296 = vld [vmem:[#allocation8 + $0x4] sm:$0xf]
    %v297 = vld [vmem:[#allocation8 + $0x8] sm:$0xf]
    %v298 = vld [vmem:[#allocation8 + $0xc] sm:$0xf]
    %v299 = vld [vmem:[#allocation8 + $0x10] sm:$0xf]
    %v300 = vld [vmem:[#allocation8 + $0x14] sm:$0xf]
    %v301 = vld [vmem:[#allocation8 + $0x18] sm:$0xf]
    %v302 = vld [vmem:[#allocation8 + $0x1c] sm:$0xf]
    %v303 = vld [vmem:[#allocation8 + $0x20] sm:$0xf]
    %v304 = vld [vmem:[#allocation8 + $0x24] sm:$0xf]
    %v305 = vld [vmem:[#allocation8 + $0x28] sm:$0xf]
    %v306 = vld [vmem:[#allocation8 + $0x2c] sm:$0xf]
    %v307 = vld [vmem:[#allocation8 + $0x30] sm:$0xf]
    %v308 = vld [vmem:[#allocation8 + $0x34] sm:$0xf]
    %v309 = vld [vmem:[#allocation8 + $0x38] sm:$0xf]
    %v310 = vld [vmem:[#allocation8 + $0x3c] sm:$0xf]
    %v311 = vld [vmem:[%s10] sm:$0x1]
    %v313 = vperm.slane %v311, 0
    %v331 = vunpack.c.l.b16 %v295
    %v332 = vunpack.c.l.b16 %v296
    %v333 = vunpack.c.l.b16 %v297
    %v334 = vunpack.c.l.b16 %v298
    %v335 = vunpack.c.l.b16 %v299
    %v336 = vunpack.c.l.b16 %v300
    %v337 = vunpack.c.l.b16 %v301
    %v338 = vunpack.c.l.b16 %v302
    %v339 = vunpack.c.l.b16 %v303
    %v340 = vunpack.c.l.b16 %v304
    %v341 = vunpack.c.l.b16 %v305
    %v342 = vunpack.c.l.b16 %v306
    %v343 = vunpack.c.l.b16 %v307
    %v344 = vunpack.c.l.b16 %v308
    %v345 = vunpack.c.l.b16 %v309
    %v346 = vunpack.c.l.b16 %v310
    %v347 = vpack.c.b16 %v332, %v331
    %v348 = vpack.c.b16 %v334, %v333
    %v349 = vpack.c.b16 %v336, %v335
    %v350 = vpack.c.b16 %v338, %v337
    %v351 = vpack.c.b16 %v340, %v339
    %v352 = vpack.c.b16 %v342, %v341
    %v353 = vpack.c.b16 %v344, %v343
    %v354 = vpack.c.b16 %v346, %v345
    %363 = vmatpush.bf16.msra.mxu0 %v354
    %364 = vmatpush.bf16.msra.mxu0 %v353
    %365 = vmatpush.bf16.msra.mxu0 %v352
    %366 = vmatpush.bf16.msra.mxu0 %v351
    %367 = vmatpush.bf16.msra.mxu0 %v350
    %368 = vmatpush.bf16.msra.mxu0 %v349
    %369 = vmatpush.bf16.msra.mxu0 %v348
    %370 = vmatpush.bf16.msra.mxu0 %v347
    %371 = vmatmul.bf16.gmra.mxu0 %v294
    %v372 = vpop.f32.mrf.mxu0
    %v373 = vadd.f32 %v313, %v372
    %v374 = vpop.f32.mrf.mxu0
    %375 = vdwg.mxu0
    %v376 = vtanh.pop %v373
    %377 = vadd.xlane.f32.xlu0 %v376
    %v378 = vpop.xlane.xlu0 %377
    %v379 = vmul.f32 %v376, %v376
    %380 = vadd.xlane.f32.xlu0 %v379
    %v381 = vpop.xlane.xlu0 %380
    %v382 = vmul.f32 %v378, 0.0625
    %v383 = vmul.f32 %v381, 0.0625
    %v384 = vmul.f32 %v382, %v382
    %v385 = vsub.f32 %v383, %v384
    %v386 = vadd.f32 %v385, 1e-05
    %v387 = vrsqrt.pop %v386
    %v388 = vmul.f32 %v387, %v386
    %v389 = vmul.f32 %v388, %v387
    %v390 = vmul.f32 0.5, %v389
    %v391 = vsub.f32 1.5, %v390
    %v392 = vmul.f32 %v387, %v391
    %vm393 = vweird.f32 %v386
    %vm394 = vweird.f32 %v387
    %vm395 = vmor %vm393, %vm394
    %v396 = vsel %vm395, %v387, %v392
    %v397 = vsub.f32 %v376, %v382
    %v398 = vmul.f32 %v397, %v396
    %v399 = vld [vmem:[%s11] sm:$0x1]
    %v401 = vperm.slane %v399, 0
    %v403 = vmul.f32 %v398, %v401
    %v404 = vld [vmem:[%s12] sm:$0x1]
    %v406 = vperm.slane %v404, 0
    %v408 = vadd.f32 %v403, %v406
    %409 = vst [vmem:[#allocation10] sm:$0xff] %v408
    // Predicated region
    $region70: #{tpu_custom_call.1} parent=1 // pred_check
      _
    $region71: #{tpu_custom_call.1} parent=1 // pred_check_branch
      %411 = sbr.rel (0) target = $region73
    $region72: #{tpu_custom_call.1} parent=1 // pred_region
      %413 = vsyncadd [#allocation4], 0
      %s415 = sshll.u32 [#allocation10], 4
      %s416 = int_to_ptr.vmem [resolvable:$true] %s415
      %s417 = sshll.u32 %s13, 4
      %s418 = int_to_ptr.hbm [resolvable:$true] %s417
      %420 = dma.vmem_to_hbm [thread:$0]  %s416, 128, %s418, [#allocation4]
    $region73: #{tpu_custom_call.1} parent=1 // pred_fallthru
      _
    // Predicated region
    $region74: #{tpu_custom_call.1} parent=1 // pred_check
      _
    $region75: #{tpu_custom_call.1} parent=1 // pred_check_branch
      %422 = sbr.rel (0) target = $region77
    $region76: #{tpu_custom_call.1} parent=1 // pred_region
      %424 = dma.done [#allocation4], 128
    $region77: #{tpu_custom_call.1} parent=1 // pred_fallthru
      _
    %425 = vsyncpa [#allocation3], 1
    %426 = vsyncpa [#allocation6], 1
    %427 = vsyncpa [#allocation9], 1
    %428 = vsyncpa [#allocation4], 1

// kernel: tpu_custom_call.1
$region0: #{tpu_custom_call.1}
  #allocation0 [shape = 'u32[]', space=smem, size = 0x4, offset = 0x4, fixed_abs, tag = 'smem constant byte address 0x4 - core index']
  #allocation1 [shape = 'u32[72,128]{1,0:T(1,128)}', space=vmem, size = 0x9000, scoped, tag = 'internal scratch']
  %s0 = inlined_call_operand.hbm [shape: f32[8,32], index: 0, kind: input, shape index: {}]
  %s1 = inlined_call_operand.hbm [shape: bf16[32,128], index: 1, kind: input, shape index: {}]
  %s2 = inlined_call_operand.vmem [shape: f32[1,128], index: 2, kind: input, shape index: {}]
  %s3 = inlined_call_operand.vmem [shape: f32[1,128], index: 3, kind: input, shape index: {}]
  %s4 = inlined_call_operand.vmem [shape: f32[1,128], index: 4, kind: input, shape index: {}]
  %s5 = inlined_call_operand.hbm [shape: bf16[128,128], index: 5, kind: input, shape index: {}]
  %s6 = inlined_call_operand.vmem [shape: f32[1,128], index: 6, kind: input, shape index: {}]
  %s7 = inlined_call_operand.vmem [shape: f32[1,128], index: 7, kind: input, shape index: {}]
  %s8 = inlined_call_operand.vmem [shape: f32[1,128], index: 8, kind: input, shape index: {}]
  %s9 = inlined_call_operand.hbm [shape: bf16[128,128], index: 9, kind: input, shape index: {}]
  %s10 = inlined_call_operand.vmem [shape: f32[1,128], index: 10, kind: input, shape index: {}]
  %s11 = inlined_call_operand.vmem [shape: f32[1,128], index: 11, kind: input, shape index: {}]
  %s12 = inlined_call_operand.vmem [shape: f32[1,128], index: 12, kind: input, shape index: {}]
  %s13 = inlined_call_operand.hbm [shape: f32[8,128], index: 13, kind: output, shape index: {}]
  %s14 = sld [smem:[#allocation0]]
  $region78: #{tpu_custom_call.1} parent=0
    _
  %s16 = ssub.s32 1, %s14
  %s17 = scalar_select 0, %s16, %s14
  $region1: #{tpu_custom_call.1} parent=0
    #allocation2 [shape = 'u8[4096]{0}', space=vmem, size = 0x1000, scoped, tag = 'input window, operand 0, single buffered']
    #allocation3 [shape = 's32[1]{0}', space=sflag, size = 0x4, scoped, tag = 'scoped memory for tpu_custom_call.1']
    #allocation4 [shape = 's32[1]{0}', space=sflag, size = 0x4, scoped, tag = 'scoped memory for tpu_custom_call.1']
    #allocation5 [shape = 'u8[8192]{0}', space=vmem, size = 0x2000, scoped, tag = 'input window, operand 1, single buffered']
    #allocation6 [shape = 's32[1]{0}', space=sflag, size = 0x4, scoped, tag = 'scoped memory for tpu_custom_call.1']
    #allocation7 [shape = 'u8[32768]{0}', space=vmem, size = 0x8000, scoped, tag = 'input window, operand 5, single buffered']
    #allocation8 [shape = 'u8[32768]{0}', space=vmem, size = 0x8000, scoped, tag = 'input window, operand 9, single buffered']
    #allocation9 [shape = 's32[1]{0}', space=sflag, size = 0x4, scoped, tag = 'scoped memory for tpu_custom_call.1']
    #allocation10 [shape = 'u8[4096]{0}', space=vmem, size = 0x1000, scoped, tag = 'output window, operand 0, single buffered']
    %18 = vsyncpa [#allocation3], 0
    %19 = vsyncpa [#allocation6], 0
    %20 = vsyncpa [#allocation9], 0
    %21 = vsyncpa [#allocation4], 0
    // Predicated region
    $region2: #{tpu_custom_call.1} parent=1 // pred_check
      _
    $region3: #{tpu_custom_call.1} parent=1 // pred_check_branch
      %23 = sbr.rel (0) target = $region5
    $region4: #{tpu_custom_call.1} parent=1 // pred_region
      %25 = vsyncadd [#allocation3], 0
      %s27 = sshll.u32 %s0, 4
      %s28 = int_to_ptr.hbm [resolvable:$true] %s27
      %s29 = sshll.u32 [#allocation2], 4
      %s30 = int_to_ptr.vmem [resolvable:$true] %s29
      %32 = dma.hbm_to_vmem [thread:$0]  %s28, 128, %s30, [#allocation3]
    $region5: #{tpu_custom_call.1} parent=1 // pred_fallthru
      _
    // Predicated region
    $region6: #{tpu_custom_call.1} parent=1 // pred_check
      _
    $region7: #{tpu_custom_call.1} parent=1 // pred_check_branch
      %34 = sbr.rel (0) target = $region9
    $region8: #{tpu_custom_call.1} parent=1 // pred_region
      %36 = vsyncadd [#allocation6], 0
      %s37 = sshll.u32 %s1, 4
      %s38 = int_to_ptr.hbm [resolvable:$true] %s37
      %s39 = sshll.u32 [#allocation5], 4
      %s40 = int_to_ptr.vmem [resolvable:$true] %s39
      %45 = dma.hbm_to_vmem [thread:$0]  %s38, 256, %s40, [#allocation6], 64, 64, 4
    $region9: #{tpu_custom_call.1} parent=1 // pred_fallthru
      _
    // Predicated region
    $region10: #{tpu_custom_call.1} parent=1 // pred_check
      _
    $region11: #{tpu_custom_call.1} parent=1 // pred_check_branch
      %47 = sbr.rel (0) target = $region13
    $region12: #{tpu_custom_call.1} parent=1 // pred_region
      _
    $region13: #{tpu_custom_call.1} parent=1 // pred_fallthru
      _
    // Predicated region
    $region14: #{tpu_custom_call.1} parent=1 // pred_check
      _
    $region15: #{tpu_custom_call.1} parent=1 // pred_check_branch
      %49 = sbr.rel (0) target = $region17
    $region16: #{tpu_custom_call.1} parent=1 // pred_region
      _
    $region17: #{tpu_custom_call.1} parent=1 // pred_fallthru
      _
    // Predicated region
    $region18: #{tpu_custom_call.1} parent=1 // pred_check
      _
    $region19: #{tpu_custom_call.1} parent=1 // pred_check_branch
      %51 = sbr.rel (0) target = $region21
    $region20: #{tpu_custom_call.1} parent=1 // pred_region
      _
    $region21: #{tpu_custom_call.1} parent=1 // pred_fallthru
      _
    // Predicated region
    $region22: #{tpu_custom_call.1} parent=1 // pred_check
      _
    $region23: #{tpu_custom_call.1} parent=1 // pred_check_branch
      %53 = sbr.rel (0) target = $region25
    $region24: #{tpu_custom_call.1} parent=1 // pred_region
      %55 = vsyncadd [#allocation6], 0
      %s56 = sshll.u32 %s5, 4
      %s57 = int_to_ptr.hbm [resolvable:$true] %s56
      %s58 = sshll.u32 [#allocation7], 4
      %s59 = int_to_ptr.vmem [resolvable:$true] %s58
      %64 = dma.hbm_to_vmem [thread:$0]  %s57, 1024, %s59, [#allocation6], 64, 64, 4
    $region25: #{tpu_custom_call.1} parent=1 // pred_fallthru
      _
    // Predicated region
    $region26: #{tpu_custom_call.1} parent=1 // pred_check
      _
    $region27: #{tpu_custom_call.1} parent=1 // pred_check_branch
      %66 = sbr.rel (0) target = $region29
    $region28: #{tpu_custom_call.1} parent=1 // pred_region
      _
    $region29: #{tpu_custom_call.1} parent=1 // pred_fallthru
      _
    // Predicated region
    $region30: #{tpu_custom_call.1} parent=1 // pred_check
      _
    $region31: #{tpu_custom_call.1} parent=1 // pred_check_branch
      %68 = sbr.rel (0) target = $region33
    $region32: #{tpu_custom_call.1} parent=1 // pred_region
      _
    $region33: #{tpu_custom_call.1} parent=1 // pred_fallthru
      _
    // Predicated region
    $region34: #{tpu_custom_call.1} parent=1 // pred_check
      _
    $region35: #{tpu_custom_call.1} parent=1 // pred_check_branch
      %70 = sbr.rel (0) target = $region37
    $region36: #{tpu_custom_call.1} parent=1 // pred_region
      _
    $region37: #{tpu_custom_call.1} parent=1 // pred_fallthru
      _
    // Predicated region
    $region38: #{tpu_custom_call.1} parent=1 // pred_check
      _
    $region39: #{tpu_custom_call.1} parent=1 // pred_check_branch
      %72 = sbr.rel (0) target = $region41
    $region40: #{tpu_custom_call.1} parent=1 // pred_region
      %74 = vsyncadd [#allocation9], 0
      %s75 = sshll.u32 %s9, 4
      %s76 = int_to_ptr.hbm [resolvable:$true] %s75
      %s77 = sshll.u32 [#allocation8], 4
      %s78 = int_to_ptr.vmem [resolvable:$true] %s77
      %83 = dma.hbm_to_vmem [thread:$0]  %s76, 1024, %s78, [#allocation9], 64, 64, 4
    $region41: #{tpu_custom_call.1} parent=1 // pred_fallthru
      _
    // Predicated region
    $region42: #{tpu_custom_call.1} parent=1 // pred_check
      _
    $region43: #{tpu_custom_call.1} parent=1 // pred_check_branch
      %85 = sbr.rel (0) target = $region45
    $region44: #{tpu_custom_call.1} parent=1 // pred_region
      _
    $region45: #{tpu_custom_call.1} parent=1 // pred_fallthru
      _
    // Predicated region
    $region46: #{tpu_custom_call.1} parent=1 // pred_check
      _
    $region47: #{tpu_custom_call.1} parent=1 // pred_check_branch
      %87 = sbr.rel (0) target = $region49
    $region48: #{tpu_custom_call.1} parent=1 // pred_region
      _
    $region49: #{tpu_custom_call.1} parent=1 // pred_fallthru
      _
    // Predicated region
    $region50: #{tpu_custom_call.1} parent=1 // pred_check
      _
    $region51: #{tpu_custom_call.1} parent=1 // pred_check_branch
      %89 = sbr.rel (0) target = $region53
    $region52: #{tpu_custom_call.1} parent=1 // pred_region
      _
    $region53: #{tpu_custom_call.1} parent=1 // pred_fallthru
      _
    // Predicated region
    $region54: #{tpu_custom_call.1} parent=1 // pred_check
      _
    $region55: #{tpu_custom_call.1} parent=1 // pred_check_branch
      %91 = sbr.rel (0) target = $region57
    $region56: #{tpu_custom_call.1} parent=1 // pred_region
      %93 = dma.done [#allocation3], 128
    $region57: #{tpu_custom_call.1} parent=1 // pred_fallthru
      _
    // Predicated region
    $region58: #{tpu_custom_call.1} parent=1 // pred_check
      _
    $region59: #{tpu_custom_call.1} parent=1 // pred_check_branch
      %95 = sbr.rel (0) target = $region61
    $region60: #{tpu_custom_call.1} parent=1 // pred_region
      %97 = dma.done [#allocation6], 256
    $region61: #{tpu_custom_call.1} parent=1 // pred_fallthru
      _
    // Predicated region
    $region62: #{tpu_custom_call.1} parent=1 // pred_check
      _
    $region63: #{tpu_custom_call.1} parent=1 // pred_check_branch
      %99 = sbr.rel (0) target = $region65
    $region64: #{tpu_custom_call.1} parent=1 // pred_region
      %101 = dma.done [#allocation6], 1024
    $region65: #{tpu_custom_call.1} parent=1 // pred_fallthru
      _
    // Predicated region
    $region66: #{tpu_custom_call.1} parent=1 // pred_check
      _
    $region67: #{tpu_custom_call.1} parent=1 // pred_check_branch
      %103 = sbr.rel (0) target = $region69
    $region68: #{tpu_custom_call.1} parent=1 // pred_region
      %105 = dma.done [#allocation9], 1024
    $region69: #{tpu_custom_call.1} parent=1 // pred_fallthru
      _
    %v107 = vld [vmem:[#allocation2] sm:$0xff]
    %v108 = vpack.c.bf16 %v107, %v107
    %v109 = vld [vmem:[#allocation5] sm:$0xf]
    %v110 = vld [vmem:[#allocation5 + $0x4] sm:$0xf]
    %v111 = vld [vmem:[#allocation5 + $0x8] sm:$0xf]
    %v112 = vld [vmem:[#allocation5 + $0xc] sm:$0xf]
    %v113 = vld [vmem:[%s2] sm:$0x1]
    %v115 = vperm.slane %v113, 0
    %v121 = vunpack.c.l.b16 %v109
    %v122 = vunpack.c.l.b16 %v110
    %v123 = vunpack.c.l.b16 %v111
    %v124 = vunpack.c.l.b16 %v112
    %v125 = vpack.c.b16 %v122, %v121
    %v126 = vpack.c.b16 %v124, %v123
    %vm129 = vcmask 261120
    %v131 = vsel %vm129, %v108, 0
    %133 = vmatpush.bf16.msra.mxu0 0
    %134 = vmatpush.bf16.msra.mxu0 0
    %135 = vmatpush.bf16.msra.mxu0 0
    %136 = vmatpush.bf16.msra.mxu0 0
    %137 = vmatpush.bf16.msra.mxu0 0
    %138 = vmatpush.bf16.msra.mxu0 0
    %139 = vmatpush.bf16.msra.mxu0 %v126
    %140 = vmatpush.bf16.msra.mxu0 %v125
    %141 = vmatmul.bf16.gmra.mxu0 %v131
    %v142 = vpop.f32.mrf.mxu0
    %v143 = vadd.f32 %v115, %v142
    %v144 = vpop.f32.mrf.mxu0
    %145 = vdwg.mxu0
    %v146 = vtanh.pop %v143
    %147 = vadd.xlane.f32.xlu0 %v146
    %v148 = vpop.xlane.xlu0 %147
    %v149 = vmul.f32 %v146, %v146
    %150 = vadd.xlane.f32.xlu0 %v149
    %v151 = vpop.xlane.xlu0 %150
    %v152 = vmul.f32 %v148, 0.015625
    %v153 = vmul.f32 %v151, 0.015625
    %v154 = vmul.f32 %v152, %v152
    %v155 = vsub.f32 %v153, %v154
    %v156 = vadd.f32 %v155, 1e-05
    %v157 = vrsqrt.pop %v156
    %v158 = vmul.f32 %v157, %v156
    %v159 = vmul.f32 %v158, %v157
    %v160 = vmul.f32 0.5, %v159
    %v161 = vsub.f32 1.5, %v160
    %v162 = vmul.f32 %v157, %v161
    %vm163 = vweird.f32 %v156
    %vm164 = vweird.f32 %v157
    %vm165 = vmor %vm163, %vm164
    %v166 = vsel %vm165, %v157, %v162
    %v167 = vsub.f32 %v146, %v152
    %v168 = vmul.f32 %v167, %v166
    %v169 = vld [vmem:[%s3] sm:$0x1]
    %v171 = vperm.slane %v169, 0
    %v173 = vmul.f32 %v168, %v171
    %v174 = vld [vmem:[%s4] sm:$0x1]
    %v176 = vperm.slane %v174, 0
    %v178 = vadd.f32 %v173, %v176
    %v179 = vpack.c.bf16 %v178, %v178
    %v180 = vld [vmem:[#allocation7] sm:$0xf]
    %v181 = vld [vmem:[#allocation7 + $0x4] sm:$0xf]
    %v182 = vld [vmem:[#allocation7 + $0x8] sm:$0xf]
    %v183 = vld [vmem:[#allocation7 + $0xc] sm:$0xf]
    %v184 = vld [vmem:[#allocation7 + $0x10] sm:$0xf]
    %v185 = vld [vmem:[#allocation7 + $0x14] sm:$0xf]
    %v186 = vld [vmem:[#allocation7 + $0x18] sm:$0xf]
    %v187 = vld [vmem:[#allocation7 + $0x1c] sm:$0xf]
    %v188 = vld [vmem:[#allocation7 + $0x20] sm:$0xf]
    %v189 = vld [vmem:[#allocation7 + $0x24] sm:$0xf]
    %v190 = vld [vmem:[#allocation7 + $0x28] sm:$0xf]
    %v191 = vld [vmem:[#allocation7 + $0x2c] sm:$0xf]
    %v192 = vld [vmem:[#allocation7 + $0x30] sm:$0xf]
    %v193 = vld [vmem:[#allocation7 + $0x34] sm:$0xf]
    %v194 = vld [vmem:[#allocation7 + $0x38] sm:$0xf]
    %v195 = vld [vmem:[#allocation7 + $0x3c] sm:$0xf]
    %v196 = vld [vmem:[%s6] sm:$0x1]
    %v198 = vperm.slane %v196, 0
    %v216 = vunpack.c.l.b16 %v180
    %v217 = vunpack.c.l.b16 %v181
    %v218 = vunpack.c.l.b16 %v182
    %v219 = vunpack.c.l.b16 %v183
    %v220 = vunpack.c.l.b16 %v184
    %v221 = vunpack.c.l.b16 %v185
    %v222 = vunpack.c.l.b16 %v186
    %v223 = vunpack.c.l.b16 %v187
    %v224 = vunpack.c.l.b16 %v188
    %v225 = vunpack.c.l.b16 %v189
    %v226 = vunpack.c.l.b16 %v190
    %v227 = vunpack.c.l.b16 %v191
    %v228 = vunpack.c.l.b16 %v192
    %v229 = vunpack.c.l.b16 %v193
    %v230 = vunpack.c.l.b16 %v194
    %v231 = vunpack.c.l.b16 %v195
    %v232 = vpack.c.b16 %v217, %v216
    %v233 = vpack.c.b16 %v219, %v218
    %v234 = vpack.c.b16 %v221, %v220
    %v235 = vpack.c.b16 %v223, %v222
    %v236 = vpack.c.b16 %v225, %v224
    %v237 = vpack.c.b16 %v227, %v226
    %v238 = vpack.c.b16 %v229, %v228
    %v239 = vpack.c.b16 %v231, %v230
    %248 = vmatpush.bf16.msra.mxu0 %v239
    %249 = vmatpush.bf16.msra.mxu0 %v238
    %250 = vmatpush.bf16.msra.mxu0 %v237
    %251 = vmatpush.bf16.msra.mxu0 %v236
    %252 = vmatpush.bf16.msra.mxu0 %v235
    %253 = vmatpush.bf16.msra.mxu0 %v234
    %254 = vmatpush.bf16.msra.mxu0 %v233
    %255 = vmatpush.bf16.msra.mxu0 %v232
    %256 = vmatmul.bf16.gmra.mxu0 %v179
    %v257 = vpop.f32.mrf.mxu0
    %v258 = vadd.f32 %v198, %v257
    %v259 = vpop.f32.mrf.mxu0
    %260 = vdwg.mxu0
    %v261 = vtanh.pop %v258
    %262 = vadd.xlane.f32.xlu0 %v261
    %v263 = vpop.xlane.xlu0 %262
    %v264 = vmul.f32 %v261, %v261
    %265 = vadd.xlane.f32.xlu0 %v264
    %v266 = vpop.xlane.xlu0 %265
    %v267 = vmul.f32 %v263, 0.020833334
    %v268 = vmul.f32 %v266, 0.020833334
    %v269 = vmul.f32 %v267, %v267
    %v270 = vsub.f32 %v268, %v269
    %v271 = vadd.f32 %v270, 1e-05
    %v272 = vrsqrt.pop %v271
    %v273 = vmul.f32 %v272, %v271
    %v274 = vmul.f32 %v273, %v272
    %v275 = vmul.f32 0.5, %v274
    %v276 = vsub.f32 1.5, %v275
    %v277 = vmul.f32 %v272, %v276
    %vm278 = vweird.f32 %v271
    %vm279 = vweird.f32 %v272
    %vm280 = vmor %vm278, %vm279
    %v281 = vsel %vm280, %v272, %v277
    %v282 = vsub.f32 %v261, %v267
    %v283 = vmul.f32 %v282, %v281
    %v284 = vld [vmem:[%s7] sm:$0x1]
    %v286 = vperm.slane %v284, 0
    %v288 = vmul.f32 %v283, %v286
    %v289 = vld [vmem:[%s8] sm:$0x1]
    %v291 = vperm.slane %v289, 0
    %v293 = vadd.f32 %v288, %v291
    %v294 = vpack.c.bf16 %v293, %v293
    %v295 = vld [vmem:[#allocation8] sm:$0xf]
    %v296 = vld [vmem:[#allocation8 + $0x4] sm:$0xf]
    %v297 = vld [vmem:[#allocation8 + $0x8] sm:$0xf]
    %v298 = vld [vmem:[#allocation8 + $0xc] sm:$0xf]
    %v299 = vld [vmem:[#allocation8 + $0x10] sm:$0xf]
    %v300 = vld [vmem:[#allocation8 + $0x14] sm:$0xf]
    %v301 = vld [vmem:[#allocation8 + $0x18] sm:$0xf]
    %v302 = vld [vmem:[#allocation8 + $0x1c] sm:$0xf]
    %v303 = vld [vmem:[#allocation8 + $0x20] sm:$0xf]
    %v304 = vld [vmem:[#allocation8 + $0x24] sm:$0xf]
    %v305 = vld [vmem:[#allocation8 + $0x28] sm:$0xf]
    %v306 = vld [vmem:[#allocation8 + $0x2c] sm:$0xf]
    %v307 = vld [vmem:[#allocation8 + $0x30] sm:$0xf]
    %v308 = vld [vmem:[#allocation8 + $0x34] sm:$0xf]
    %v309 = vld [vmem:[#allocation8 + $0x38] sm:$0xf]
    %v310 = vld [vmem:[#allocation8 + $0x3c] sm:$0xf]
    %v311 = vld [vmem:[%s10] sm:$0x1]
    %v313 = vperm.slane %v311, 0
    %v331 = vunpack.c.l.b16 %v295
    %v332 = vunpack.c.l.b16 %v296
    %v333 = vunpack.c.l.b16 %v297
    %v334 = vunpack.c.l.b16 %v298
    %v335 = vunpack.c.l.b16 %v299
    %v336 = vunpack.c.l.b16 %v300
    %v337 = vunpack.c.l.b16 %v301
    %v338 = vunpack.c.l.b16 %v302
    %v339 = vunpack.c.l.b16 %v303
    %v340 = vunpack.c.l.b16 %v304
    %v341 = vunpack.c.l.b16 %v305
    %v342 = vunpack.c.l.b16 %v306
    %v343 = vunpack.c.l.b16 %v307
    %v344 = vunpack.c.l.b16 %v308
    %v345 = vunpack.c.l.b16 %v309
    %v346 = vunpack.c.l.b16 %v310
    %v347 = vpack.c.b16 %v332, %v331
    %v348 = vpack.c.b16 %v334, %v333
    %v349 = vpack.c.b16 %v336, %v335
    %v350 = vpack.c.b16 %v338, %v337
    %v351 = vpack.c.b16 %v340, %v339
    %v352 = vpack.c.b16 %v342, %v341
    %v353 = vpack.c.b16 %v344, %v343
    %v354 = vpack.c.b16 %v346, %v345
    %363 = vmatpush.bf16.msra.mxu0 %v354
    %364 = vmatpush.bf16.msra.mxu0 %v353
    %365 = vmatpush.bf16.msra.mxu0 %v352
    %366 = vmatpush.bf16.msra.mxu0 %v351
    %367 = vmatpush.bf16.msra.mxu0 %v350
    %368 = vmatpush.bf16.msra.mxu0 %v349
    %369 = vmatpush.bf16.msra.mxu0 %v348
    %370 = vmatpush.bf16.msra.mxu0 %v347
    %371 = vmatmul.bf16.gmra.mxu0 %v294
    %v372 = vpop.f32.mrf.mxu0
    %v373 = vadd.f32 %v313, %v372
    %v374 = vpop.f32.mrf.mxu0
    %375 = vdwg.mxu0
    %v376 = vtanh.pop %v373
    %377 = vadd.xlane.f32.xlu0 %v376
    %v378 = vpop.xlane.xlu0 %377
    %v379 = vmul.f32 %v376, %v376
    %380 = vadd.xlane.f32.xlu0 %v379
    %v381 = vpop.xlane.xlu0 %380
    %v382 = vmul.f32 %v378, 0.0625
    %v383 = vmul.f32 %v381, 0.0625
    %v384 = vmul.f32 %v382, %v382
    %v385 = vsub.f32 %v383, %v384
    %v386 = vadd.f32 %v385, 1e-05
    %v387 = vrsqrt.pop %v386
    %v388 = vmul.f32 %v387, %v386
    %v389 = vmul.f32 %v388, %v387
    %v390 = vmul.f32 0.5, %v389
    %v391 = vsub.f32 1.5, %v390
    %v392 = vmul.f32 %v387, %v391
    %vm393 = vweird.f32 %v386
    %vm394 = vweird.f32 %v387
    %vm395 = vmor %vm393, %vm394
    %v396 = vsel %vm395, %v387, %v392
    %v397 = vsub.f32 %v376, %v382
    %v398 = vmul.f32 %v397, %v396
    %v399 = vld [vmem:[%s11] sm:$0x1]
    %v401 = vperm.slane %v399, 0
    %v403 = vmul.f32 %v398, %v401
    %v404 = vld [vmem:[%s12] sm:$0x1]
    %v406 = vperm.slane %v404, 0
    %v408 = vadd.f32 %v403, %v406
    %409 = vst [vmem:[#allocation10] sm:$0xff] %v408
    // Predicated region
    $region70: #{tpu_custom_call.1} parent=1 // pred_check
      _
    $region71: #{tpu_custom_call.1} parent=1 // pred_check_branch
      %411 = sbr.rel (0) target = $region73
    $region72: #{tpu_custom_call.1} parent=1 // pred_region
      %413 = vsyncadd [#allocation4], 0
      %s415 = sshll.u32 [#allocation10], 4
      %s416 = int_to_ptr.vmem [resolvable:$true] %s415
      %s417 = sshll.u32 %s13, 4
      %s418 = int_to_ptr.hbm [resolvable:$true] %s417
      %420 = dma.vmem_to_hbm [thread:$0]  %s416, 128, %s418, [#allocation4]
    $region73: #{tpu_custom_call.1} parent=1 // pred_fallthru
      _
    // Predicated region
    $region74: #{tpu_custom_call.1} parent=1 // pred_check
      _
    $region75: #{tpu_custom_call.1} parent=1 // pred_check_branch
      %422 = sbr.rel (0) target = $region77
    $region76: #{tpu_custom_call.1} parent=1 // pred_region
      %424 = dma.done [#allocation4], 128
    $region77: #{tpu_custom_call.1} parent=1 // pred_fallthru
      _
    %425 = vsyncpa [#allocation3], 1
    %426 = vsyncpa [#allocation6], 1
    %427 = vsyncpa [#allocation9], 1
    %428 = vsyncpa [#allocation4], 1

</llo_original>
